<compile_context>
chip_gen: v7x
topology: tpu7x:2x2x1
jax: 0.10.0
libtpu: 0.0.40
codegen_flags: <defaults>
</compile_context>

<pallas_src>
import math

import jax
import jax.numpy as jnp
from jax.experimental import pallas as pl
from jax.experimental.pallas import tpu as pltpu

_LANE = 128   # lane width / MXU tile dim
_TB = 128     # batch tile (multiple of 128 -> full MXU M-dim, unmasked stores)


def _round_up(n, m):
    return ((n + m - 1) // m) * m


def _ae_kernel(x_ref,
               we1_ref, be1_ref, we2_ref, be2_ref,
               wd1_ref, bd1_ref, wd2_ref, bd2_ref,
               out_ref, code_ref):
    """Fused encoder + decoder forward for one batch tile.

    x:    (TB, Dp)   bf16
    we1:  (Dp, Hp)   be1: (1, Hp)
    we2:  (Hp, Cp)   be2: (1, Cp)
    wd1:  (Cp, Hp)   bd1: (1, Hp)
    wd2:  (Hp, Dp)   bd2: (1, Dp)
    out:  (TB, Dp)   f32
    code: (TB, Cp)   f32
    """
    cdt = we1_ref.dtype  # compute (streaming) dtype, f32 accumulation on MXU
    x = x_ref[...]

    # ---- encoder ----
    h = jnp.dot(x, we1_ref[...], preferred_element_type=jnp.float32) + be1_ref[...]
    h = jnp.maximum(h, 0.0)
    code = (jnp.dot(h.astype(cdt), we2_ref[...],
                    preferred_element_type=jnp.float32) + be2_ref[...])

    # ---- decoder ----
    h2 = (jnp.dot(code.astype(cdt), wd1_ref[...],
                  preferred_element_type=jnp.float32) + bd1_ref[...])
    h2 = jnp.maximum(h2, 0.0)
    out = (jnp.dot(h2.astype(cdt), wd2_ref[...],
                   preferred_element_type=jnp.float32) + bd2_ref[...])

    code_ref[...] = code.astype(code_ref.dtype)
    out_ref[...] = out.astype(out_ref.dtype)


def _pack_params(params, d_pad, h_pad, c_pad, compute_dtype):
    """Zero-pad weights/biases to lane-aligned shapes; weights -> compute dtype."""
    we1, be1, we2, be2, wd1, bd1, wd2, bd2 = params

    def pad2(a, rows, cols):
        return jnp.pad(a, ((0, rows - a.shape[0]), (0, cols - a.shape[1])))

    we1p = pad2(we1, d_pad, h_pad).astype(compute_dtype)
    be1p = pad2(be1, 1, h_pad).astype(jnp.float32)
    we2p = pad2(we2, h_pad, c_pad).astype(compute_dtype)
    be2p = pad2(be2, 1, c_pad).astype(jnp.float32)
    wd1p = pad2(wd1, c_pad, h_pad).astype(compute_dtype)
    bd1p = pad2(bd1, 1, h_pad).astype(jnp.float32)
    wd2p = pad2(wd2, h_pad, d_pad).astype(compute_dtype)
    bd2p = pad2(bd2, 1, d_pad).astype(jnp.float32)
    return (we1p, be1p, we2p, be2p, wd1p, bd1p, wd2p, bd2p)


def autoencoder_forward(data_nchw, params, epoch=0, n_epochs=1,
                        *, compute_dtype=jnp.bfloat16, tb=_TB):
    """Flatten NCHW input and run the fused, batch-tiled Pallas kernel.

    Returns (out, code), matching the PyTorch forward's tuple order.
    `epoch` / `n_epochs` are unused in this encoder instantiation.
    """
    del epoch, n_epochs  # TODO(synk): encoder ignores schedule args in this instantiation.
    B = data_nchw.shape[0]
    D = int(math.prod(data_nchw.shape[1:]))
    we1, _, we2, _, _, _, _, _ = params
    H = we1.shape[1]
    C = we2.shape[1]

    # Lane/tile-aligned padded sizes.
    Dp = _round_up(D, _LANE)
    Hp = _round_up(H, _LANE)
    Cp = _round_up(C, _LANE)
    Bp = _round_up(max(B, 1), tb)
    n_tiles = Bp // tb

    # Pad + cast input; zero rows/cols contribute exactly zero to the matmuls.
    x = data_nchw.reshape(B, D)
    x = jnp.pad(x, ((0, Bp - B), (0, Dp - D))).astype(compute_dtype)

    (we1p, be1p, we2p, be2p,
     wd1p, bd1p, wd2p, bd2p) = _pack_params(params, Dp, Hp, Cp, compute_dtype)

    # --- BlockSpecs: activations tiled over batch, weights/biases resident ---
    def tiled(shape):
        return pl.BlockSpec(shape, lambda i: (i, 0))

    def resident(shape):
        return pl.BlockSpec(shape, lambda i: (0, 0))

    in_specs = [
        tiled((tb, Dp)),
        resident((Dp, Hp)), resident((1, Hp)),
        resident((Hp, Cp)), resident((1, Cp)),
        resident((Cp, Hp)), resident((1, Hp)),
        resident((Hp, Dp)), resident((1, Dp)),
    ]
    out_specs = [
        tiled((tb, Dp)),
        tiled((tb, Cp)),
    ]

    # --- VMEM budget: double-buffered blocks + headroom, clamped for v7x ---
    def nbytes(shape, dtype):
        return math.prod(shape) * jnp.dtype(dtype).itemsize

    block_bytes = (
        nbytes((tb, Dp), compute_dtype)
        + nbytes((Dp, Hp), compute_dtype) + nbytes((1, Hp), jnp.float32)
        + nbytes((Hp, Cp), compute_dtype) + nbytes((1, Cp), jnp.float32)
        + nbytes((Cp, Hp), compute_dtype) + nbytes((1, Hp), jnp.float32)
        + nbytes((Hp, Dp), compute_dtype) + nbytes((1, Dp), jnp.float32)
        + nbytes((tb, Dp), jnp.float32) + nbytes((tb, Cp), jnp.float32)
    )
    vmem_limit = min(max(2 * block_bytes + (2 << 20), 32 << 20), 64 << 20)

    # --- Cost estimate for the XLA scheduler around the custom call ---
    flops = 2 * Bp * (Dp * Hp + Hp * Cp + Cp * Hp + Hp * Dp)
    bytes_accessed = (
        nbytes((Bp, Dp), compute_dtype)
        + nbytes((Dp, Hp), compute_dtype) + nbytes((Hp, Cp), compute_dtype)
        + nbytes((Cp, Hp), compute_dtype) + nbytes((Hp, Dp), compute_dtype)
        + nbytes((1, Hp), jnp.float32) * 2
        + nbytes((1, Cp), jnp.float32) + nbytes((1, Dp), jnp.float32)
        + nbytes((Bp, Dp), jnp.float32) + nbytes((Bp, Cp), jnp.float32)
    )

    out_p, code_p = pl.pallas_call(
        _ae_kernel,
        grid=(n_tiles,),
        in_specs=in_specs,
        out_specs=out_specs,
        out_shape=(
            jax.ShapeDtypeStruct((Bp, Dp), jnp.float32),
            jax.ShapeDtypeStruct((Bp, Cp), jnp.float32),
        ),
        compiler_params=pltpu.CompilerParams(
            dimension_semantics=("parallel",),
            vmem_limit_bytes=int(vmem_limit)),
        cost_estimate=pl.CostEstimate(
            flops=int(flops),
            transcendentals=0,
            bytes_accessed=int(bytes_accessed)),
    )(x, we1p, be1p, we2p, be2p, wd1p, bd1p, wd2p, bd2p)

    # Strip batch / lane padding.
    return out_p[:B, :D], code_p[:B, :C]


def init_params(key, d_in, hidden, code_size):
    """Deterministic parameter init (uniform fan-in, PyTorch-Linear style)."""
    ks = jax.random.split(key, 8)

    def lin(k_w, k_b, fan_in, fan_out):
        bound = 1.0 / jnp.sqrt(fan_in)
        w = jax.random.uniform(k_w, (fan_in, fan_out), jnp.float32, -bound, bound)
        b = jax.random.uniform(k_b, (1, fan_out), jnp.float32, -bound, bound)
        return w, b

    we1, be1 = lin(ks[0], ks[1], d_in, hidden)
    we2, be2 = lin(ks[2], ks[3], hidden, code_size)
    wd1, bd1 = lin(ks[4], ks[5], code_size, hidden)
    wd2, bd2 = lin(ks[6], ks[7], hidden, d_in)
    return (we1, be1, we2, be2, wd1, bd1, wd2, bd2)


def reference_forward(data_nchw, params, compute_dtype=jnp.bfloat16):
    """Pure-JAX reference matching the kernel's compute dtypes."""
    we1, be1, we2, be2, wd1, bd1, wd2, bd2 = params
    B = data_nchw.shape[0]
    cast = lambda a: a.astype(compute_dtype)
    x = cast(data_nchw.reshape(B, -1))
    h = jnp.maximum(
        jnp.dot(x, cast(we1), preferred_element_type=jnp.float32) + be1, 0.0)
    code = jnp.dot(cast(h), cast(we2), preferred_element_type=jnp.float32) + be2
    h2 = jnp.maximum(
        jnp.dot(cast(code), cast(wd1), preferred_element_type=jnp.float32) + bd1, 0.0)
    out = jnp.dot(cast(h2), cast(wd2), preferred_element_type=jnp.float32) + bd2
    return out, code


if __name__ == "__main__":
    # Small deterministic example: NCHW input [2, 4, 16, 16] -> D = 1024.
    B, C_in, Himg, Wimg = 2, 4, 16, 16
    HIDDEN = 32
    CODE_SIZE = 8

    key = jax.random.PRNGKey(0)
    k_data, k_params = jax.random.split(key)
    data = jax.random.normal(k_data, (B, C_in, Himg, Wimg), jnp.float32)
    params = init_params(k_params, C_in * Himg * Wimg, HIDDEN, CODE_SIZE)

    out, code = autoencoder_forward(data, params, epoch=0, n_epochs=10)
    out, code = jax.block_until_ready((out, code))

    out_ref, code_ref = reference_forward(data, params)
    assert out.shape == (B, C_in * Himg * Wimg), out.shape
    assert code.shape == (B, CODE_SIZE), code.shape
    assert jnp.allclose(out, out_ref, atol=1e-2, rtol=1e-2), \
        float(jnp.max(jnp.abs(out - out_ref)))
    assert jnp.allclose(code, code_ref, atol=1e-2, rtol=1e-2), \
        float(jnp.max(jnp.abs(code - code_ref)))

    print("KERNEL_OK")
</pallas_src>

<mosaic_0001>
module attributes {stable_mosaic.version = 11 : i64} {
  func.func @_ae_kernel(%arg0: i32, %arg1: memref<128x1024xbf16, #tpu.memory_space<vmem>>, %arg2: memref<1024x128xbf16, #tpu.memory_space<vmem>>, %arg3: memref<1x128xf32, #tpu.memory_space<vmem>>, %arg4: memref<128x128xbf16, #tpu.memory_space<vmem>>, %arg5: memref<1x128xf32, #tpu.memory_space<vmem>>, %arg6: memref<128x128xbf16, #tpu.memory_space<vmem>>, %arg7: memref<1x128xf32, #tpu.memory_space<vmem>>, %arg8: memref<128x1024xbf16, #tpu.memory_space<vmem>>, %arg9: memref<1x1024xf32, #tpu.memory_space<vmem>>, %arg10: memref<128x1024xf32, #tpu.memory_space<vmem>>, %arg11: memref<128x128xf32, #tpu.memory_space<vmem>>) attributes {dimension_semantics = [#tpu.dimension_semantics<parallel>], iteration_bounds = array<i64: 1>, scalar_prefetch = 0 : i64, scratch_operands = 0 : i64, tpu.core_type = #tpu.core_type<tc>, window_params = [{transform_indices = @transform_0, window_bounds = array<i64: 128, 1024>}, {pipeline_mode = #tpu.pipeline_mode<synchronous>, transform_indices = @transform_1, window_bounds = array<i64: 1024, 128>}, {pipeline_mode = #tpu.pipeline_mode<synchronous>, transform_indices = @transform_2, window_bounds = array<i64: 1, 128>}, {pipeline_mode = #tpu.pipeline_mode<synchronous>, transform_indices = @transform_3, window_bounds = array<i64: 128, 128>}, {pipeline_mode = #tpu.pipeline_mode<synchronous>, transform_indices = @transform_4, window_bounds = array<i64: 1, 128>}, {pipeline_mode = #tpu.pipeline_mode<synchronous>, transform_indices = @transform_5, window_bounds = array<i64: 128, 128>}, {pipeline_mode = #tpu.pipeline_mode<synchronous>, transform_indices = @transform_6, window_bounds = array<i64: 1, 128>}, {pipeline_mode = #tpu.pipeline_mode<synchronous>, transform_indices = @transform_7, window_bounds = array<i64: 128, 1024>}, {pipeline_mode = #tpu.pipeline_mode<synchronous>, transform_indices = @transform_8, window_bounds = array<i64: 1, 1024>}, {transform_indices = @transform_9, window_bounds = array<i64: 128, 1024>}, {transform_indices = @transform_10, window_bounds = array<i64: 128, 128>}]} {
    %c0 = arith.constant 0 : index
    %c0_0 = arith.constant 0 : index
    %0 = vector.load %arg1[%c0, %c0_0] : memref<128x1024xbf16, #tpu.memory_space<vmem>>, vector<128x1024xbf16>
    %c0_1 = arith.constant 0 : index
    %c0_2 = arith.constant 0 : index
    %1 = vector.load %arg2[%c0_1, %c0_2] : memref<1024x128xbf16, #tpu.memory_space<vmem>>, vector<1024x128xbf16>
    %cst = arith.constant dense<0.000000e+00> : vector<128x128xf32>
    %2 = tpu.matmul %0, %1, %cst {dimension_numbers = #tpu.dot_dimension_numbers<[1], [0], [0], [1], [0, 0, 1, 1], [], []>} : vector<128x1024xbf16>, vector<1024x128xbf16>, vector<128x128xf32> -> vector<128x128xf32>
    %c0_3 = arith.constant 0 : index
    %c0_4 = arith.constant 0 : index
    %3 = vector.load %arg3[%c0_3, %c0_4] : memref<1x128xf32, #tpu.memory_space<vmem>>, vector<1x128xf32>
    %4 = vector.broadcast %3 : vector<1x128xf32> to vector<128x128xf32>
    %5 = arith.addf %2, %4 : vector<128x128xf32>
    %cst_5 = arith.constant 0.000000e+00 : f32
    %6 = vector.broadcast %cst_5 : f32 to vector<128x128xf32>
    %7 = arith.maximumf %5, %6 : vector<128x128xf32>
    %8 = arith.truncf %7 : vector<128x128xf32> to vector<128x128xbf16>
    %c0_6 = arith.constant 0 : index
    %c0_7 = arith.constant 0 : index
    %9 = vector.load %arg4[%c0_6, %c0_7] : memref<128x128xbf16, #tpu.memory_space<vmem>>, vector<128x128xbf16>
    %cst_8 = arith.constant dense<0.000000e+00> : vector<128x128xf32>
    %10 = tpu.matmul %8, %9, %cst_8 {dimension_numbers = #tpu.dot_dimension_numbers<[1], [0], [0], [1], [0, 0, 1, 1], [], []>} : vector<128x128xbf16>, vector<128x128xbf16>, vector<128x128xf32> -> vector<128x128xf32>
    %c0_9 = arith.constant 0 : index
    %c0_10 = arith.constant 0 : index
    %11 = vector.load %arg5[%c0_9, %c0_10] : memref<1x128xf32, #tpu.memory_space<vmem>>, vector<1x128xf32>
    %12 = vector.broadcast %11 : vector<1x128xf32> to vector<128x128xf32>
    %13 = arith.addf %10, %12 : vector<128x128xf32>
    %14 = arith.truncf %13 : vector<128x128xf32> to vector<128x128xbf16>
    %c0_11 = arith.constant 0 : index
    %c0_12 = arith.constant 0 : index
    %15 = vector.load %arg6[%c0_11, %c0_12] : memref<128x128xbf16, #tpu.memory_space<vmem>>, vector<128x128xbf16>
    %cst_13 = arith.constant dense<0.000000e+00> : vector<128x128xf32>
    %16 = tpu.matmul %14, %15, %cst_13 {dimension_numbers = #tpu.dot_dimension_numbers<[1], [0], [0], [1], [0, 0, 1, 1], [], []>} : vector<128x128xbf16>, vector<128x128xbf16>, vector<128x128xf32> -> vector<128x128xf32>
    %c0_14 = arith.constant 0 : index
    %c0_15 = arith.constant 0 : index
    %17 = vector.load %arg7[%c0_14, %c0_15] : memref<1x128xf32, #tpu.memory_space<vmem>>, vector<1x128xf32>
    %18 = vector.broadcast %17 : vector<1x128xf32> to vector<128x128xf32>
    %19 = arith.addf %16, %18 : vector<128x128xf32>
    %cst_16 = arith.constant 0.000000e+00 : f32
    %20 = vector.broadcast %cst_16 : f32 to vector<128x128xf32>
    %21 = arith.maximumf %19, %20 : vector<128x128xf32>
    %22 = arith.truncf %21 : vector<128x128xf32> to vector<128x128xbf16>
    %c0_17 = arith.constant 0 : index
    %c0_18 = arith.constant 0 : index
    %23 = vector.load %arg8[%c0_17, %c0_18] : memref<128x1024xbf16, #tpu.memory_space<vmem>>, vector<128x1024xbf16>
    %cst_19 = arith.constant dense<0.000000e+00> : vector<128x1024xf32>
    %24 = tpu.matmul %22, %23, %cst_19 {dimension_numbers = #tpu.dot_dimension_numbers<[1], [0], [0], [1], [0, 0, 1, 1], [], []>} : vector<128x128xbf16>, vector<128x1024xbf16>, vector<128x1024xf32> -> vector<128x1024xf32>
    %c0_20 = arith.constant 0 : index
    %c0_21 = arith.constant 0 : index
    %25 = vector.load %arg9[%c0_20, %c0_21] : memref<1x1024xf32, #tpu.memory_space<vmem>>, vector<1x1024xf32>
    %26 = vector.broadcast %25 : vector<1x1024xf32> to vector<128x1024xf32>
    %27 = arith.addf %24, %26 : vector<128x1024xf32>
    %c0_22 = arith.constant 0 : index
    %c0_23 = arith.constant 0 : index
    %28 = vector.load %arg11[%c0_22, %c0_23] : memref<128x128xf32, #tpu.memory_space<vmem>>, vector<128x128xf32>
    tpu.vector_store %arg11[%c0_22, %c0_23], %13 {strides = array<i32>} : memref<128x128xf32, #tpu.memory_space<vmem>>, vector<128x128xf32>,
    %c0_24 = arith.constant 0 : index
    %c0_25 = arith.constant 0 : index
    %29 = vector.load %arg10[%c0_24, %c0_25] : memref<128x1024xf32, #tpu.memory_space<vmem>>, vector<128x1024xf32>
    tpu.vector_store %arg10[%c0_24, %c0_25], %27 {strides = array<i32>} : memref<128x1024xf32, #tpu.memory_space<vmem>>, vector<128x1024xf32>,
    return
  }
  func.func @transform_0(%arg0: i32) -> (i32, i32) {
    %c0_i32 = arith.constant 0 : i32
    %c0_i32_0 = arith.constant 0 : i32
    return %arg0, %c0_i32 : i32, i32
  }
  func.func @transform_1(%arg0: i32) -> (i32, i32) {
    %c0_i32 = arith.constant 0 : i32
    %c0_i32_0 = arith.constant 0 : i32
    %c0_i32_1 = arith.constant 0 : i32
    return %c0_i32, %c0_i32_0 : i32, i32
  }
  func.func @transform_2(%arg0: i32) -> (i32, i32) {
    %c0_i32 = arith.constant 0 : i32
    %c0_i32_0 = arith.constant 0 : i32
    %c0_i32_1 = arith.constant 0 : i32
    return %c0_i32, %c0_i32_0 : i32, i32
  }
  func.func @transform_3(%arg0: i32) -> (i32, i32) {
    %c0_i32 = arith.constant 0 : i32
    %c0_i32_0 = arith.constant 0 : i32
    %c0_i32_1 = arith.constant 0 : i32
    return %c0_i32, %c0_i32_0 : i32, i32
  }
  func.func @transform_4(%arg0: i32) -> (i32, i32) {
    %c0_i32 = arith.constant 0 : i32
    %c0_i32_0 = arith.constant 0 : i32
    %c0_i32_1 = arith.constant 0 : i32
    return %c0_i32, %c0_i32_0 : i32, i32
  }
  func.func @transform_5(%arg0: i32) -> (i32, i32) {
    %c0_i32 = arith.constant 0 : i32
    %c0_i32_0 = arith.constant 0 : i32
    %c0_i32_1 = arith.constant 0 : i32
    return %c0_i32, %c0_i32_0 : i32, i32
  }
  func.func @transform_6(%arg0: i32) -> (i32, i32) {
    %c0_i32 = arith.constant 0 : i32
    %c0_i32_0 = arith.constant 0 : i32
    %c0_i32_1 = arith.constant 0 : i32
    return %c0_i32, %c0_i32_0 : i32, i32
  }
  func.func @transform_7(%arg0: i32) -> (i32, i32) {
    %c0_i32 = arith.constant 0 : i32
    %c0_i32_0 = arith.constant 0 : i32
    %c0_i32_1 = arith.constant 0 : i32
    return %c0_i32, %c0_i32_0 : i32, i32
  }
  func.func @transform_8(%arg0: i32) -> (i32, i32) {
    %c0_i32 = arith.constant 0 : i32
    %c0_i32_0 = arith.constant 0 : i32
    %c0_i32_1 = arith.constant 0 : i32
    return %c0_i32, %c0_i32_0 : i32, i32
  }
  func.func @transform_9(%arg0: i32) -> (i32, i32) {
    %c0_i32 = arith.constant 0 : i32
    %c0_i32_0 = arith.constant 0 : i32
    return %arg0, %c0_i32 : i32, i32
  }
  func.func @transform_10(%arg0: i32) -> (i32, i32) {
    %c0_i32 = arith.constant 0 : i32
    %c0_i32_0 = arith.constant 0 : i32
    return %arg0, %c0_i32 : i32, i32
  }
}

</mosaic_0001>

<llo_original>
// kernel: tpu_custom_call.1
$region0: #{tpu_custom_call.1}
  #allocation0 [shape = 'u32[]', space=smem, size = 0x4, offset = 0x4, fixed_abs, tag = 'smem constant byte address 0x4 - core index']
  #allocation1 [shape = 'u32[144,128]{1,0:T(1,128)}', space=vmem, size = 0x12000, scoped, tag = 'internal scratch']
  %s0 = inlined_call_operand.hbm [shape: bf16[128,1024], index: 0, kind: input, shape index: {}]
  %s1 = inlined_call_operand.hbm [shape: bf16[1024,128], index: 1, kind: input, shape index: {}]
  %s2 = inlined_call_operand.vmem [shape: f32[1,128], index: 2, kind: input, shape index: {}]
  %s3 = inlined_call_operand.hbm [shape: bf16[128,128], index: 3, kind: input, shape index: {}]
  %s4 = inlined_call_operand.vmem [shape: f32[1,128], index: 4, kind: input, shape index: {}]
  %s5 = inlined_call_operand.hbm [shape: bf16[128,128], index: 5, kind: input, shape index: {}]
  %s6 = inlined_call_operand.vmem [shape: f32[1,128], index: 6, kind: input, shape index: {}]
  %s7 = inlined_call_operand.hbm [shape: bf16[128,1024], index: 7, kind: input, shape index: {}]
  %s8 = inlined_call_operand.vmem [shape: f32[1,1024], index: 8, kind: input, shape index: {}]
  %s9 = inlined_call_operand.hbm [shape: f32[128,1024], index: 9, kind: output, shape index: {0}]
  %s10 = inlined_call_operand.hbm [shape: f32[128,128], index: 10, kind: output, shape index: {1}]
  %11 = xla_tuple %s9, %s10
  %s12 = sld [smem:[#allocation0]]
  $region74: #{tpu_custom_call.1} parent=0
    _
  %s14 = ssub.s32 1, %s12
  %s15 = scalar_select 0, %s14, %s12
  $region1: #{tpu_custom_call.1} parent=0
    #allocation2 [shape = 'u8[262144]{0}', space=vmem, size = 0x40000, scoped, tag = 'input window, operand 0, single buffered']
    #allocation3 [shape = 's32[1]{0}', space=sflag, size = 0x4, scoped, tag = 'scoped memory for tpu_custom_call.1']
    #allocation4 [shape = 's32[1]{0}', space=sflag, size = 0x4, scoped, tag = 'scoped memory for tpu_custom_call.1']
    #allocation5 [shape = 'u8[262144]{0}', space=vmem, size = 0x40000, scoped, tag = 'input window, operand 1, single buffered']
    #allocation6 [shape = 's32[1]{0}', space=sflag, size = 0x4, scoped, tag = 'scoped memory for tpu_custom_call.1']
    #allocation7 [shape = 'u8[32768]{0}', space=vmem, size = 0x8000, scoped, tag = 'input window, operand 3, single buffered']
    #allocation8 [shape = 'u8[32768]{0}', space=vmem, size = 0x8000, scoped, tag = 'input window, operand 5, single buffered']
    #allocation9 [shape = 's32[1]{0}', space=sflag, size = 0x4, scoped, tag = 'scoped memory for tpu_custom_call.1']
    #allocation10 [shape = 'u8[262144]{0}', space=vmem, size = 0x40000, scoped, tag = 'input window, operand 7, single buffered']
    #allocation11 [shape = 'u8[524288]{0}', space=vmem, size = 0x80000, scoped, tag = 'output window, operand 0, single buffered']
    #allocation12 [shape = 'u8[65536]{0}', space=vmem, size = 0x10000, scoped, tag = 'output window, operand 1, single buffered']
    #allocation13 [shape = 's32[1]{0}', space=sflag, size = 0x4, scoped, tag = 'scoped memory for tpu_custom_call.1']
    %16 = vsyncpa [#allocation3], 0
    %17 = vsyncpa [#allocation6], 0
    %18 = vsyncpa [#allocation9], 0
    %19 = vsyncpa [#allocation4], 0
    %20 = vsyncpa [#allocation13], 0
    // Predicated region
    $region2: #{tpu_custom_call.1} parent=1 // pred_check
      _
    $region3: #{tpu_custom_call.1} parent=1 // pred_check_branch
      %22 = sbr.rel (0) target = $region5
    $region4: #{tpu_custom_call.1} parent=1 // pred_region
      %s24 = ssub.s32 8192, 8192
      %25 = vsyncadd [#allocation3], %s24
      %s26 = sshll.u32 [#allocation2], 4
      %s27 = int_to_ptr.vmem [resolvable:$true] %s26
      %32 = dma.hbm_to_vmem [thread:$0]  %s0, 8192, %s27, [#allocation3], 512, 512, 32
    $region5: #{tpu_custom_call.1} parent=1 // pred_fallthru
      _
    // Predicated region
    $region6: #{tpu_custom_call.1} parent=1 // pred_check
      _
    $region7: #{tpu_custom_call.1} parent=1 // pred_check_branch
      %34 = sbr.rel (0) target = $region9
    $region8: #{tpu_custom_call.1} parent=1 // pred_region
      %s36 = ssub.s32 8192, 8192
      %37 = vsyncadd [#allocation6], %s36
      %s38 = sshll.u32 [#allocation5], 4
      %s39 = int_to_ptr.vmem [resolvable:$true] %s38
      %44 = dma.hbm_to_vmem [thread:$0]  %s1, 8192, %s39, [#allocation6], 64, 64, 4
    $region9: #{tpu_custom_call.1} parent=1 // pred_fallthru
      _
    // Predicated region
    $region10: #{tpu_custom_call.1} parent=1 // pred_check
      _
    $region11: #{tpu_custom_call.1} parent=1 // pred_check_branch
      %46 = sbr.rel (0) target = $region13
    $region12: #{tpu_custom_call.1} parent=1 // pred_region
      _
    $region13: #{tpu_custom_call.1} parent=1 // pred_fallthru
      _
    // Predicated region
    $region14: #{tpu_custom_call.1} parent=1 // pred_check
      _
    $region15: #{tpu_custom_call.1} parent=1 // pred_check_branch
      %48 = sbr.rel (0) target = $region17
    $region16: #{tpu_custom_call.1} parent=1 // pred_region
      %s50 = ssub.s32 1024, 1024
      %51 = vsyncadd [#allocation6], %s50
      %s52 = sshll.u32 [#allocation7], 4
      %s53 = int_to_ptr.vmem [resolvable:$true] %s52
      %58 = dma.hbm_to_vmem [thread:$0]  %s3, 1024, %s53, [#allocation6], 64, 64, 4
    $region17: #{tpu_custom_call.1} parent=1 // pred_fallthru
      _
    // Predicated region
    $region18: #{tpu_custom_call.1} parent=1 // pred_check
      _
    $region19: #{tpu_custom_call.1} parent=1 // pred_check_branch
      %60 = sbr.rel (0) target = $region21
    $region20: #{tpu_custom_call.1} parent=1 // pred_region
      _
    $region21: #{tpu_custom_call.1} parent=1 // pred_fallthru
      _
    // Predicated region
    $region22: #{tpu_custom_call.1} parent=1 // pred_check
      _
    $region23: #{tpu_custom_call.1} parent=1 // pred_check_branch
      %62 = sbr.rel (0) target = $region25
    $region24: #{tpu_custom_call.1} parent=1 // pred_region
      %s64 = ssub.s32 1024, 1024
      %65 = vsyncadd [#allocation9], %s64
      %s66 = sshll.u32 [#allocation8], 4
      %s67 = int_to_ptr.vmem [resolvable:$true] %s66
      %72 = dma.hbm_to_vmem [thread:$0]  %s5, 1024, %s67, [#allocation9], 64, 64, 4
    $region25: #{tpu_custom_call.1} parent=1 // pred_fallthru
      _
    // Predicated region
    $region26: #{tpu_custom_call.1} parent=1 // pred_check
      _
    $region27: #{tpu_custom_call.1} parent=1 // pred_check_branch
      %74 = sbr.rel (0) target = $region29
    $region28: #{tpu_custom_call.1} parent=1 // pred_region
      _
    $region29: #{tpu_custom_call.1} parent=1 // pred_fallthru
      _
    // Predicated region
    $region30: #{tpu_custom_call.1} parent=1 // pred_check
      _
    $region31: #{tpu_custom_call.1} parent=1 // pred_check_branch
      %76 = sbr.rel (0) target = $region33
    $region32: #{tpu_custom_call.1} parent=1 // pred_region
      %s78 = ssub.s32 8192, 8192
      %79 = vsyncadd [#allocation9], %s78
      %s80 = sshll.u32 [#allocation10], 4
      %s81 = int_to_ptr.vmem [resolvable:$true] %s80
      %86 = dma.hbm_to_vmem [thread:$0]  %s7, 8192, %s81, [#allocation9], 512, 512, 32
    $region33: #{tpu_custom_call.1} parent=1 // pred_fallthru
      _
    // Predicated region
    $region34: #{tpu_custom_call.1} parent=1 // pred_check
      _
    $region35: #{tpu_custom_call.1} parent=1 // pred_check_branch
      %88 = sbr.rel (0) target = $region37
    $region36: #{tpu_custom_call.1} parent=1 // pred_region
      _
    $region37: #{tpu_custom_call.1} parent=1 // pred_fallthru
      _
    // Predicated region
    $region38: #{tpu_custom_call.1} parent=1 // pred_check
      _
    $region39: #{tpu_custom_call.1} parent=1 // pred_check_branch
      %90 = sbr.rel (0) target = $region41
    $region40: #{tpu_custom_call.1} parent=1 // pred_region
      %91 = dma.done [#allocation3], 8192
    $region41: #{tpu_custom_call.1} parent=1 // pred_fallthru
      _
    // Predicated region
    $region42: #{tpu_custom_call.1} parent=1 // pred_check
      _
    $region43: #{tpu_custom_call.1} parent=1 // pred_check_branch
      %93 = sbr.rel (0) target = $region45
    $region44: #{tpu_custom_call.1} parent=1 // pred_region
      %94 = dma.done [#allocation6], 8192
    $region45: #{tpu_custom_call.1} parent=1 // pred_fallthru
      _
    // Predicated region
    $region46: #{tpu_custom_call.1} parent=1 // pred_check
      _
    $region47: #{tpu_custom_call.1} parent=1 // pred_check_branch
      %96 = sbr.rel (0) target = $region49
    $region48: #{tpu_custom_call.1} parent=1 // pred_region
      %97 = dma.done [#allocation6], 1024
    $region49: #{tpu_custom_call.1} parent=1 // pred_fallthru
      _
    // Predicated region
    $region50: #{tpu_custom_call.1} parent=1 // pred_check
      _
    $region51: #{tpu_custom_call.1} parent=1 // pred_check_branch
      %99 = sbr.rel (0) target = $region53
    $region52: #{tpu_custom_call.1} parent=1 // pred_region
      %100 = dma.done [#allocation9], 1024
    $region53: #{tpu_custom_call.1} parent=1 // pred_fallthru
      _
    // Predicated region
    $region54: #{tpu_custom_call.1} parent=1 // pred_check
      _
    $region55: #{tpu_custom_call.1} parent=1 // pred_check_branch
      %102 = sbr.rel (0) target = $region57
    $region56: #{tpu_custom_call.1} parent=1 // pred_region
      %103 = dma.done [#allocation9], 8192
    $region57: #{tpu_custom_call.1} parent=1 // pred_fallthru
      _
    %v105 = vld [vmem:[#allocation2] sm:$0xff]
    %v106 = vld [vmem:[#allocation2 + $0x8] sm:$0xff]
    %v107 = vld [vmem:[#allocation2 + $0x10] sm:$0xff]
    %v108 = vld [vmem:[#allocation2 + $0x18] sm:$0xff]
    %v109 = vld [vmem:[#allocation2 + $0x20] sm:$0xff]
    %v110 = vld [vmem:[#allocation2 + $0x28] sm:$0xff]
    %v111 = vld [vmem:[#allocation2 + $0x30] sm:$0xff]
    %v112 = vld [vmem:[#allocation2 + $0x38] sm:$0xff]
    %v113 = vld [vmem:[#allocation2 + $0x40] sm:$0xff]
    %v114 = vld [vmem:[#allocation2 + $0x48] sm:$0xff]
    %v115 = vld [vmem:[#allocation2 + $0x50] sm:$0xff]
    %v116 = vld [vmem:[#allocation2 + $0x58] sm:$0xff]
    %v117 = vld [vmem:[#allocation2 + $0x60] sm:$0xff]
    %v118 = vld [vmem:[#allocation2 + $0x68] sm:$0xff]
    %v119 = vld [vmem:[#allocation2 + $0x70] sm:$0xff]
    %v120 = vld [vmem:[#allocation2 + $0x78] sm:$0xff]
    %v121 = vld [vmem:[#allocation2 + $0x80] sm:$0xff]
    %v122 = vld [vmem:[#allocation2 + $0x88] sm:$0xff]
    %v123 = vld [vmem:[#allocation2 + $0x90] sm:$0xff]
    %v124 = vld [vmem:[#allocation2 + $0x98] sm:$0xff]
    %v125 = vld [vmem:[#allocation2 + $0xa0] sm:$0xff]
    %v126 = vld [vmem:[#allocation2 + $0xa8] sm:$0xff]
    %v127 = vld [vmem:[#allocation2 + $0xb0] sm:$0xff]
    %v128 = vld [vmem:[#allocation2 + $0xb8] sm:$0xff]
    %v129 = vld [vmem:[#allocation2 + $0xc0] sm:$0xff]
    %v130 = vld [vmem:[#allocation2 + $0xc8] sm:$0xff]
    %v131 = vld [vmem:[#allocation2 + $0xd0] sm:$0xff]
    %v132 = vld [vmem:[#allocation2 + $0xd8] sm:$0xff]
    %v133 = vld [vmem:[#allocation2 + $0xe0] sm:$0xff]
    %v134 = vld [vmem:[#allocation2 + $0xe8] sm:$0xff]
    %v135 = vld [vmem:[#allocation2 + $0xf0] sm:$0xff]
    %v136 = vld [vmem:[#allocation2 + $0xf8] sm:$0xff]
    %v137 = vld [vmem:[#allocation2 + $0x100] sm:$0xff]
    %v138 = vld [vmem:[#allocation2 + $0x108] sm:$0xff]
    %v139 = vld [vmem:[#allocation2 + $0x110] sm:$0xff]
    %v140 = vld [vmem:[#allocation2 + $0x118] sm:$0xff]
    %v141 = vld [vmem:[#allocation2 + $0x120] sm:$0xff]
    %v142 = vld [vmem:[#allocation2 + $0x128] sm:$0xff]
    %v143 = vld [vmem:[#allocation2 + $0x130] sm:$0xff]
    %v144 = vld [vmem:[#allocation2 + $0x138] sm:$0xff]
    %v145 = vld [vmem:[#allocation2 + $0x140] sm:$0xff]
    %v146 = vld [vmem:[#allocation2 + $0x148] sm:$0xff]
    %v147 = vld [vmem:[#allocation2 + $0x150] sm:$0xff]
    %v148 = vld [vmem:[#allocation2 + $0x158] sm:$0xff]
    %v149 = vld [vmem:[#allocation2 + $0x160] sm:$0xff]
    %v150 = vld [vmem:[#allocation2 + $0x168] sm:$0xff]
    %v151 = vld [vmem:[#allocation2 + $0x170] sm:$0xff]
    %v152 = vld [vmem:[#allocation2 + $0x178] sm:$0xff]
    %v153 = vld [vmem:[#allocation2 + $0x180] sm:$0xff]
    %v154 = vld [vmem:[#allocation2 + $0x188] sm:$0xff]
    %v155 = vld [vmem:[#allocation2 + $0x190] sm:$0xff]
    %v156 = vld [vmem:[#allocation2 + $0x198] sm:$0xff]
    %v157 = vld [vmem:[#allocation2 + $0x1a0] sm:$0xff]
    %v158 = vld [vmem:[#allocation2 + $0x1a8] sm:$0xff]
    %v159 = vld [vmem:[#allocation2 + $0x1b0] sm:$0xff]
    %v160 = vld [vmem:[#allocation2 + $0x1b8] sm:$0xff]
    %v161 = vld [vmem:[#allocation2 + $0x1c0] sm:$0xff]
    %v162 = vld [vmem:[#allocation2 + $0x1c8] sm:$0xff]
    %v163 = vld [vmem:[#allocation2 + $0x1d0] sm:$0xff]
    %v164 = vld [vmem:[#allocation2 + $0x1d8] sm:$0xff]
    %v165 = vld [vmem:[#allocation2 + $0x1e0] sm:$0xff]
    %v166 = vld [vmem:[#allocation2 + $0x1e8] sm:$0xff]
    %v167 = vld [vmem:[#allocation2 + $0x1f0] sm:$0xff]
    %v168 = vld [vmem:[#allocation2 + $0x1f8] sm:$0xff]
    %v169 = vld [vmem:[#allocation5] sm:$0xf]
    %v170 = vld [vmem:[#allocation5 + $0x4] sm:$0xf]
    %v171 = vld [vmem:[#allocation5 + $0x8] sm:$0xf]
    %v172 = vld [vmem:[#allocation5 + $0xc] sm:$0xf]
    %v173 = vld [vmem:[#allocation5 + $0x10] sm:$0xf]
    %v174 = vld [vmem:[#allocation5 + $0x14] sm:$0xf]
    %v175 = vld [vmem:[#allocation5 + $0x18] sm:$0xf]
    %v176 = vld [vmem:[#allocation5 + $0x1c] sm:$0xf]
    %v177 = vld [vmem:[#allocation5 + $0x20] sm:$0xf]
    %v178 = vld [vmem:[#allocation5 + $0x24] sm:$0xf]
    %v179 = vld [vmem:[#allocation5 + $0x28] sm:$0xf]
    %v180 = vld [vmem:[#allocation5 + $0x2c] sm:$0xf]
    %v181 = vld [vmem:[#allocation5 + $0x30] sm:$0xf]
    %v182 = vld [vmem:[#allocation5 + $0x34] sm:$0xf]
    %v183 = vld [vmem:[#allocation5 + $0x38] sm:$0xf]
    %v184 = vld [vmem:[#allocation5 + $0x3c] sm:$0xf]
    %v185 = vld [vmem:[#allocation5 + $0x40] sm:$0xf]
    %v186 = vld [vmem:[#allocation5 + $0x44] sm:$0xf]
    %v187 = vld [vmem:[#allocation5 + $0x48] sm:$0xf]
    %v188 = vld [vmem:[#allocation5 + $0x4c] sm:$0xf]
    %v189 = vld [vmem:[#allocation5 + $0x50] sm:$0xf]
    %v190 = vld [vmem:[#allocation5 + $0x54] sm:$0xf]
    %v191 = vld [vmem:[#allocation5 + $0x58] sm:$0xf]
    %v192 = vld [vmem:[#allocation5 + $0x5c] sm:$0xf]
    %v193 = vld [vmem:[#allocation5 + $0x60] sm:$0xf]
    %v194 = vld [vmem:[#allocation5 + $0x64] sm:$0xf]
    %v195 = vld [vmem:[#allocation5 + $0x68] sm:$0xf]
    %v196 = vld [vmem:[#allocation5 + $0x6c] sm:$0xf]
    %v197 = vld [vmem:[#allocation5 + $0x70] sm:$0xf]
    %v198 = vld [vmem:[#allocation5 + $0x74] sm:$0xf]
    %v199 = vld [vmem:[#allocation5 + $0x78] sm:$0xf]
    %v200 = vld [vmem:[#allocation5 + $0x7c] sm:$0xf]
    %v201 = vld [vmem:[#allocation5 + $0x80] sm:$0xf]
    %v202 = vld [vmem:[#allocation5 + $0x84] sm:$0xf]
    %v203 = vld [vmem:[#allocation5 + $0x88] sm:$0xf]
    %v204 = vld [vmem:[#allocation5 + $0x8c] sm:$0xf]
    %v205 = vld [vmem:[#allocation5 + $0x90] sm:$0xf]
    %v206 = vld [vmem:[#allocation5 + $0x94] sm:$0xf]
    %v207 = vld [vmem:[#allocation5 + $0x98] sm:$0xf]
    %v208 = vld [vmem:[#allocation5 + $0x9c] sm:$0xf]
    %v209 = vld [vmem:[#allocation5 + $0xa0] sm:$0xf]
    %v210 = vld [vmem:[#allocation5 + $0xa4] sm:$0xf]
    %v211 = vld [vmem:[#allocation5 + $0xa8] sm:$0xf]
    %v212 = vld [vmem:[#allocation5 + $0xac] sm:$0xf]
    %v213 = vld [vmem:[#allocation5 + $0xb0] sm:$0xf]
    %v214 = vld [vmem:[#allocation5 + $0xb4] sm:$0xf]
    %v215 = vld [vmem:[#allocation5 + $0xb8] sm:$0xf]
    %v216 = vld [vmem:[#allocation5 + $0xbc] sm:$0xf]
    %v217 = vld [vmem:[#allocation5 + $0xc0] sm:$0xf]
    %v218 = vld [vmem:[#allocation5 + $0xc4] sm:$0xf]
    %v219 = vld [vmem:[#allocation5 + $0xc8] sm:$0xf]
    %v220 = vld [vmem:[#allocation5 + $0xcc] sm:$0xf]
    %v221 = vld [vmem:[#allocation5 + $0xd0] sm:$0xf]
    %v222 = vld [vmem:[#allocation5 + $0xd4] sm:$0xf]
    %v223 = vld [vmem:[#allocation5 + $0xd8] sm:$0xf]
    %v224 = vld [vmem:[#allocation5 + $0xdc] sm:$0xf]
    %v225 = vld [vmem:[#allocation5 + $0xe0] sm:$0xf]
    %v226 = vld [vmem:[#allocation5 + $0xe4] sm:$0xf]
    %v227 = vld [vmem:[#allocation5 + $0xe8] sm:$0xf]
    %v228 = vld [vmem:[#allocation5 + $0xec] sm:$0xf]
    %v229 = vld [vmem:[#allocation5 + $0xf0] sm:$0xf]
    %v230 = vld [vmem:[#allocation5 + $0xf4] sm:$0xf]
    %v231 = vld [vmem:[#allocation5 + $0xf8] sm:$0xf]
    %v232 = vld [vmem:[#allocation5 + $0xfc] sm:$0xf]
    %v233 = vld [vmem:[#allocation5 + $0x100] sm:$0xf]
    %v234 = vld [vmem:[#allocation5 + $0x104] sm:$0xf]
    %v235 = vld [vmem:[#allocation5 + $0x108] sm:$0xf]
    %v236 = vld [vmem:[#allocation5 + $0x10c] sm:$0xf]
    %v237 = vld [vmem:[#allocation5 + $0x110] sm:$0xf]
    %v238 = vld [vmem:[#allocation5 + $0x114] sm:$0xf]
    %v239 = vld [vmem:[#allocation5 + $0x118] sm:$0xf]
    %v240 = vld [vmem:[#allocation5 + $0x11c] sm:$0xf]
    %v241 = vld [vmem:[#allocation5 + $0x120] sm:$0xf]
    %v242 = vld [vmem:[#allocation5 + $0x124] sm:$0xf]
    %v243 = vld [vmem:[#allocation5 + $0x128] sm:$0xf]
    %v244 = vld [vmem:[#allocation5 + $0x12c] sm:$0xf]
    %v245 = vld [vmem:[#allocation5 + $0x130] sm:$0xf]
    %v246 = vld [vmem:[#allocation5 + $0x134] sm:$0xf]
    %v247 = vld [vmem:[#allocation5 + $0x138] sm:$0xf]
    %v248 = vld [vmem:[#allocation5 + $0x13c] sm:$0xf]
    %v249 = vld [vmem:[#allocation5 + $0x140] sm:$0xf]
    %v250 = vld [vmem:[#allocation5 + $0x144] sm:$0xf]
    %v251 = vld [vmem:[#allocation5 + $0x148] sm:$0xf]
    %v252 = vld [vmem:[#allocation5 + $0x14c] sm:$0xf]
    %v253 = vld [vmem:[#allocation5 + $0x150] sm:$0xf]
    %v254 = vld [vmem:[#allocation5 + $0x154] sm:$0xf]
    %v255 = vld [vmem:[#allocation5 + $0x158] sm:$0xf]
    %v256 = vld [vmem:[#allocation5 + $0x15c] sm:$0xf]
    %v257 = vld [vmem:[#allocation5 + $0x160] sm:$0xf]
    %v258 = vld [vmem:[#allocation5 + $0x164] sm:$0xf]
    %v259 = vld [vmem:[#allocation5 + $0x168] sm:$0xf]
    %v260 = vld [vmem:[#allocation5 + $0x16c] sm:$0xf]
    %v261 = vld [vmem:[#allocation5 + $0x170] sm:$0xf]
    %v262 = vld [vmem:[#allocation5 + $0x174] sm:$0xf]
    %v263 = vld [vmem:[#allocation5 + $0x178] sm:$0xf]
    %v264 = vld [vmem:[#allocation5 + $0x17c] sm:$0xf]
    %v265 = vld [vmem:[#allocation5 + $0x180] sm:$0xf]
    %v266 = vld [vmem:[#allocation5 + $0x184] sm:$0xf]
    %v267 = vld [vmem:[#allocation5 + $0x188] sm:$0xf]
    %v268 = vld [vmem:[#allocation5 + $0x18c] sm:$0xf]
    %v269 = vld [vmem:[#allocation5 + $0x190] sm:$0xf]
    %v270 = vld [vmem:[#allocation5 + $0x194] sm:$0xf]
    %v271 = vld [vmem:[#allocation5 + $0x198] sm:$0xf]
    %v272 = vld [vmem:[#allocation5 + $0x19c] sm:$0xf]
    %v273 = vld [vmem:[#allocation5 + $0x1a0] sm:$0xf]
    %v274 = vld [vmem:[#allocation5 + $0x1a4] sm:$0xf]
    %v275 = vld [vmem:[#allocation5 + $0x1a8] sm:$0xf]
    %v276 = vld [vmem:[#allocation5 + $0x1ac] sm:$0xf]
    %v277 = vld [vmem:[#allocation5 + $0x1b0] sm:$0xf]
    %v278 = vld [vmem:[#allocation5 + $0x1b4] sm:$0xf]
    %v279 = vld [vmem:[#allocation5 + $0x1b8] sm:$0xf]
    %v280 = vld [vmem:[#allocation5 + $0x1bc] sm:$0xf]
    %v281 = vld [vmem:[#allocation5 + $0x1c0] sm:$0xf]
    %v282 = vld [vmem:[#allocation5 + $0x1c4] sm:$0xf]
    %v283 = vld [vmem:[#allocation5 + $0x1c8] sm:$0xf]
    %v284 = vld [vmem:[#allocation5 + $0x1cc] sm:$0xf]
    %v285 = vld [vmem:[#allocation5 + $0x1d0] sm:$0xf]
    %v286 = vld [vmem:[#allocation5 + $0x1d4] sm:$0xf]
    %v287 = vld [vmem:[#allocation5 + $0x1d8] sm:$0xf]
    %v288 = vld [vmem:[#allocation5 + $0x1dc] sm:$0xf]
    %v289 = vld [vmem:[#allocation5 + $0x1e0] sm:$0xf]
    %v290 = vld [vmem:[#allocation5 + $0x1e4] sm:$0xf]
    %v291 = vld [vmem:[#allocation5 + $0x1e8] sm:$0xf]
    %v292 = vld [vmem:[#allocation5 + $0x1ec] sm:$0xf]
    %v293 = vld [vmem:[#allocation5 + $0x1f0] sm:$0xf]
    %v294 = vld [vmem:[#allocation5 + $0x1f4] sm:$0xf]
    %v295 = vld [vmem:[#allocation5 + $0x1f8] sm:$0xf]
    %v296 = vld [vmem:[#allocation5 + $0x1fc] sm:$0xf]
    %v297 = vld [vmem:[%s2] sm:$0x1]
    %v299 = vlaneseq
    %v300 = vshrl.u32 %v299, 7
    %v301 = vsub.s32 0, %v300
    %v302 = vrot.slane %v297, %v301
    %v368 = vunpack.c.l.b16 %v105
    %v369 = vunpack.c.h.b16 %v105
    %v370 = vunpack.c.l.b16 %v106
    %v371 = vunpack.c.h.b16 %v106
    %v372 = vunpack.c.l.b16 %v107
    %v373 = vunpack.c.h.b16 %v107
    %v374 = vunpack.c.l.b16 %v108
    %v375 = vunpack.c.h.b16 %v108
    %v376 = vunpack.c.l.b16 %v109
    %v377 = vunpack.c.h.b16 %v109
    %v378 = vunpack.c.l.b16 %v110
    %v379 = vunpack.c.h.b16 %v110
    %v380 = vunpack.c.l.b16 %v111
    %v381 = vunpack.c.h.b16 %v111
    %v382 = vunpack.c.l.b16 %v112
    %v383 = vunpack.c.h.b16 %v112
    %v384 = vunpack.c.l.b16 %v113
    %v385 = vunpack.c.h.b16 %v113
    %v386 = vunpack.c.l.b16 %v114
    %v387 = vunpack.c.h.b16 %v114
    %v388 = vunpack.c.l.b16 %v115
    %v389 = vunpack.c.h.b16 %v115
    %v390 = vunpack.c.l.b16 %v116
    %v391 = vunpack.c.h.b16 %v116
    %v392 = vunpack.c.l.b16 %v117
    %v393 = vunpack.c.h.b16 %v117
    %v394 = vunpack.c.l.b16 %v118
    %v395 = vunpack.c.h.b16 %v118
    %v396 = vunpack.c.l.b16 %v119
    %v397 = vunpack.c.h.b16 %v119
    %v398 = vunpack.c.l.b16 %v120
    %v399 = vunpack.c.h.b16 %v120
    %v400 = vunpack.c.l.b16 %v121
    %v401 = vunpack.c.h.b16 %v121
    %v402 = vunpack.c.l.b16 %v122
    %v403 = vunpack.c.h.b16 %v122
    %v404 = vunpack.c.l.b16 %v123
    %v405 = vunpack.c.h.b16 %v123
    %v406 = vunpack.c.l.b16 %v124
    %v407 = vunpack.c.h.b16 %v124
    %v408 = vunpack.c.l.b16 %v125
    %v409 = vunpack.c.h.b16 %v125
    %v410 = vunpack.c.l.b16 %v126
    %v411 = vunpack.c.h.b16 %v126
    %v412 = vunpack.c.l.b16 %v127
    %v413 = vunpack.c.h.b16 %v127
    %v414 = vunpack.c.l.b16 %v128
    %v415 = vunpack.c.h.b16 %v128
    %v416 = vunpack.c.l.b16 %v129
    %v417 = vunpack.c.h.b16 %v129
    %v418 = vunpack.c.l.b16 %v130
    %v419 = vunpack.c.h.b16 %v130
    %v420 = vunpack.c.l.b16 %v131
    %v421 = vunpack.c.h.b16 %v131
    %v422 = vunpack.c.l.b16 %v132
    %v423 = vunpack.c.h.b16 %v132
    %v424 = vunpack.c.l.b16 %v133
    %v425 = vunpack.c.h.b16 %v133
    %v426 = vunpack.c.l.b16 %v134
    %v427 = vunpack.c.h.b16 %v134
    %v428 = vunpack.c.l.b16 %v135
    %v429 = vunpack.c.h.b16 %v135
    %v430 = vunpack.c.l.b16 %v136
    %v431 = vunpack.c.h.b16 %v136
    %v432 = vunpack.c.l.b16 %v137
    %v433 = vunpack.c.h.b16 %v137
    %v434 = vunpack.c.l.b16 %v138
    %v435 = vunpack.c.h.b16 %v138
    %v436 = vunpack.c.l.b16 %v139
    %v437 = vunpack.c.h.b16 %v139
    %v438 = vunpack.c.l.b16 %v140
    %v439 = vunpack.c.h.b16 %v140
    %v440 = vunpack.c.l.b16 %v141
    %v441 = vunpack.c.h.b16 %v141
    %v442 = vunpack.c.l.b16 %v142
    %v443 = vunpack.c.h.b16 %v142
    %v444 = vunpack.c.l.b16 %v143
    %v445 = vunpack.c.h.b16 %v143
    %v446 = vunpack.c.l.b16 %v144
    %v447 = vunpack.c.h.b16 %v144
    %v448 = vunpack.c.l.b16 %v145
    %v449 = vunpack.c.h.b16 %v145
    %v450 = vunpack.c.l.b16 %v146
    %v451 = vunpack.c.h.b16 %v146
    %v452 = vunpack.c.l.b16 %v147
    %v453 = vunpack.c.h.b16 %v147
    %v454 = vunpack.c.l.b16 %v148
    %v455 = vunpack.c.h.b16 %v148
    %v456 = vunpack.c.l.b16 %v149
    %v457 = vunpack.c.h.b16 %v149
    %v458 = vunpack.c.l.b16 %v150
    %v459 = vunpack.c.h.b16 %v150
    %v460 = vunpack.c.l.b16 %v151
    %v461 = vunpack.c.h.b16 %v151
    %v462 = vunpack.c.l.b16 %v152
    %v463 = vunpack.c.h.b16 %v152
    %v464 = vunpack.c.l.b16 %v153
    %v465 = vunpack.c.h.b16 %v153
    %v466 = vunpack.c.l.b16 %v154
    %v467 = vunpack.c.h.b16 %v154
    %v468 = vunpack.c.l.b16 %v155
    %v469 = vunpack.c.h.b16 %v155
    %v470 = vunpack.c.l.b16 %v156
    %v471 = vunpack.c.h.b16 %v156
    %v472 = vunpack.c.l.b16 %v157
    %v473 = vunpack.c.h.b16 %v157
    %v474 = vunpack.c.l.b16 %v158
    %v475 = vunpack.c.h.b16 %v158
    %v476 = vunpack.c.l.b16 %v159
    %v477 = vunpack.c.h.b16 %v159
    %v478 = vunpack.c.l.b16 %v160
    %v479 = vunpack.c.h.b16 %v160
    %v480 = vunpack.c.l.b16 %v161
    %v481 = vunpack.c.h.b16 %v161
    %v482 = vunpack.c.l.b16 %v162
    %v483 = vunpack.c.h.b16 %v162
    %v484 = vunpack.c.l.b16 %v163
    %v485 = vunpack.c.h.b16 %v163
    %v486 = vunpack.c.l.b16 %v164
    %v487 = vunpack.c.h.b16 %v164
    %v488 = vunpack.c.l.b16 %v165
    %v489 = vunpack.c.h.b16 %v165
    %v490 = vunpack.c.l.b16 %v166
    %v491 = vunpack.c.h.b16 %v166
    %v492 = vunpack.c.l.b16 %v167
    %v493 = vunpack.c.h.b16 %v167
    %v494 = vunpack.c.l.b16 %v168
    %v495 = vunpack.c.h.b16 %v168
    %v496 = vpack.c.b16 %v376, %v368
    %v497 = vpack.c.b16 %v377, %v369
    %v498 = vpack.c.b16 %v378, %v370
    %v499 = vpack.c.b16 %v379, %v371
    %v500 = vpack.c.b16 %v380, %v372
    %v501 = vpack.c.b16 %v381, %v373
    %v502 = vpack.c.b16 %v382, %v374
    %v503 = vpack.c.b16 %v383, %v375
    %v504 = vpack.c.b16 %v392, %v384
    %v505 = vpack.c.b16 %v393, %v385
    %v506 = vpack.c.b16 %v394, %v386
    %v507 = vpack.c.b16 %v395, %v387
    %v508 = vpack.c.b16 %v396, %v388
    %v509 = vpack.c.b16 %v397, %v389
    %v510 = vpack.c.b16 %v398, %v390
    %v511 = vpack.c.b16 %v399, %v391
    %v512 = vpack.c.b16 %v408, %v400
    %v513 = vpack.c.b16 %v409, %v401
    %v514 = vpack.c.b16 %v410, %v402
    %v515 = vpack.c.b16 %v411, %v403
    %v516 = vpack.c.b16 %v412, %v404
    %v517 = vpack.c.b16 %v413, %v405
    %v518 = vpack.c.b16 %v414, %v406
    %v519 = vpack.c.b16 %v415, %v407
    %v520 = vpack.c.b16 %v424, %v416
    %v521 = vpack.c.b16 %v425, %v417
    %v522 = vpack.c.b16 %v426, %v418
    %v523 = vpack.c.b16 %v427, %v419
    %v524 = vpack.c.b16 %v428, %v420
    %v525 = vpack.c.b16 %v429, %v421
    %v526 = vpack.c.b16 %v430, %v422
    %v527 = vpack.c.b16 %v431, %v423
    %v528 = vpack.c.b16 %v440, %v432
    %v529 = vpack.c.b16 %v441, %v433
    %v530 = vpack.c.b16 %v442, %v434
    %v531 = vpack.c.b16 %v443, %v435
    %v532 = vpack.c.b16 %v444, %v436
    %v533 = vpack.c.b16 %v445, %v437
    %v534 = vpack.c.b16 %v446, %v438
    %v535 = vpack.c.b16 %v447, %v439
    %v536 = vpack.c.b16 %v456, %v448
    %v537 = vpack.c.b16 %v457, %v449
    %v538 = vpack.c.b16 %v458, %v450
    %v539 = vpack.c.b16 %v459, %v451
    %v540 = vpack.c.b16 %v460, %v452
    %v541 = vpack.c.b16 %v461, %v453
    %v542 = vpack.c.b16 %v462, %v454
    %v543 = vpack.c.b16 %v463, %v455
    %v544 = vpack.c.b16 %v472, %v464
    %v545 = vpack.c.b16 %v473, %v465
    %v546 = vpack.c.b16 %v474, %v466
    %v547 = vpack.c.b16 %v475, %v467
    %v548 = vpack.c.b16 %v476, %v468
    %v549 = vpack.c.b16 %v477, %v469
    %v550 = vpack.c.b16 %v478, %v470
    %v551 = vpack.c.b16 %v479, %v471
    %v552 = vpack.c.b16 %v488, %v480
    %v553 = vpack.c.b16 %v489, %v481
    %v554 = vpack.c.b16 %v490, %v482
    %v555 = vpack.c.b16 %v491, %v483
    %v556 = vpack.c.b16 %v492, %v484
    %v557 = vpack.c.b16 %v493, %v485
    %v558 = vpack.c.b16 %v494, %v486
    %v559 = vpack.c.b16 %v495, %v487
    %v752 = vunpack.c.l.b16 %v169
    %v753 = vunpack.c.l.b16 %v170
    %v754 = vunpack.c.l.b16 %v171
    %v755 = vunpack.c.l.b16 %v172
    %v756 = vunpack.c.l.b16 %v173
    %v757 = vunpack.c.l.b16 %v174
    %v758 = vunpack.c.l.b16 %v175
    %v759 = vunpack.c.l.b16 %v176
    %v760 = vunpack.c.l.b16 %v177
    %v761 = vunpack.c.l.b16 %v178
    %v762 = vunpack.c.l.b16 %v179
    %v763 = vunpack.c.l.b16 %v180
    %v764 = vunpack.c.l.b16 %v181
    %v765 = vunpack.c.l.b16 %v182
    %v766 = vunpack.c.l.b16 %v183
    %v767 = vunpack.c.l.b16 %v184
    %v768 = vunpack.c.l.b16 %v185
    %v769 = vunpack.c.l.b16 %v186
    %v770 = vunpack.c.l.b16 %v187
    %v771 = vunpack.c.l.b16 %v188
    %v772 = vunpack.c.l.b16 %v189
    %v773 = vunpack.c.l.b16 %v190
    %v774 = vunpack.c.l.b16 %v191
    %v775 = vunpack.c.l.b16 %v192
    %v776 = vunpack.c.l.b16 %v193
    %v777 = vunpack.c.l.b16 %v194
    %v778 = vunpack.c.l.b16 %v195
    %v779 = vunpack.c.l.b16 %v196
    %v780 = vunpack.c.l.b16 %v197
    %v781 = vunpack.c.l.b16 %v198
    %v782 = vunpack.c.l.b16 %v199
    %v783 = vunpack.c.l.b16 %v200
    %v784 = vunpack.c.l.b16 %v201
    %v785 = vunpack.c.l.b16 %v202
    %v786 = vunpack.c.l.b16 %v203
    %v787 = vunpack.c.l.b16 %v204
    %v788 = vunpack.c.l.b16 %v205
    %v789 = vunpack.c.l.b16 %v206
    %v790 = vunpack.c.l.b16 %v207
    %v791 = vunpack.c.l.b16 %v208
    %v792 = vunpack.c.l.b16 %v209
    %v793 = vunpack.c.l.b16 %v210
    %v794 = vunpack.c.l.b16 %v211
    %v795 = vunpack.c.l.b16 %v212
    %v796 = vunpack.c.l.b16 %v213
    %v797 = vunpack.c.l.b16 %v214
    %v798 = vunpack.c.l.b16 %v215
    %v799 = vunpack.c.l.b16 %v216
    %v800 = vunpack.c.l.b16 %v217
    %v801 = vunpack.c.l.b16 %v218
    %v802 = vunpack.c.l.b16 %v219
    %v803 = vunpack.c.l.b16 %v220
    %v804 = vunpack.c.l.b16 %v221
    %v805 = vunpack.c.l.b16 %v222
    %v806 = vunpack.c.l.b16 %v223
    %v807 = vunpack.c.l.b16 %v224
    %v808 = vunpack.c.l.b16 %v225
    %v809 = vunpack.c.l.b16 %v226
    %v810 = vunpack.c.l.b16 %v227
    %v811 = vunpack.c.l.b16 %v228
    %v812 = vunpack.c.l.b16 %v229
    %v813 = vunpack.c.l.b16 %v230
    %v814 = vunpack.c.l.b16 %v231
    %v815 = vunpack.c.l.b16 %v232
    %v816 = vunpack.c.l.b16 %v233
    %v817 = vunpack.c.l.b16 %v234
    %v818 = vunpack.c.l.b16 %v235
    %v819 = vunpack.c.l.b16 %v236
    %v820 = vunpack.c.l.b16 %v237
    %v821 = vunpack.c.l.b16 %v238
    %v822 = vunpack.c.l.b16 %v239
    %v823 = vunpack.c.l.b16 %v240
    %v824 = vunpack.c.l.b16 %v241
    %v825 = vunpack.c.l.b16 %v242
    %v826 = vunpack.c.l.b16 %v243
    %v827 = vunpack.c.l.b16 %v244
    %v828 = vunpack.c.l.b16 %v245
    %v829 = vunpack.c.l.b16 %v246
    %v830 = vunpack.c.l.b16 %v247
    %v831 = vunpack.c.l.b16 %v248
    %v832 = vunpack.c.l.b16 %v249
    %v833 = vunpack.c.l.b16 %v250
    %v834 = vunpack.c.l.b16 %v251
    %v835 = vunpack.c.l.b16 %v252
    %v836 = vunpack.c.l.b16 %v253
    %v837 = vunpack.c.l.b16 %v254
    %v838 = vunpack.c.l.b16 %v255
    %v839 = vunpack.c.l.b16 %v256
    %v840 = vunpack.c.l.b16 %v257
    %v841 = vunpack.c.l.b16 %v258
    %v842 = vunpack.c.l.b16 %v259
    %v843 = vunpack.c.l.b16 %v260
    %v844 = vunpack.c.l.b16 %v261
    %v845 = vunpack.c.l.b16 %v262
    %v846 = vunpack.c.l.b16 %v263
    %v847 = vunpack.c.l.b16 %v264
    %v848 = vunpack.c.l.b16 %v265
    %v849 = vunpack.c.l.b16 %v266
    %v850 = vunpack.c.l.b16 %v267
    %v851 = vunpack.c.l.b16 %v268
    %v852 = vunpack.c.l.b16 %v269
    %v853 = vunpack.c.l.b16 %v270
    %v854 = vunpack.c.l.b16 %v271
    %v855 = vunpack.c.l.b16 %v272
    %v856 = vunpack.c.l.b16 %v273
    %v857 = vunpack.c.l.b16 %v274
    %v858 = vunpack.c.l.b16 %v275
    %v859 = vunpack.c.l.b16 %v276
    %v860 = vunpack.c.l.b16 %v277
    %v861 = vunpack.c.l.b16 %v278
    %v862 = vunpack.c.l.b16 %v279
    %v863 = vunpack.c.l.b16 %v280
    %v864 = vunpack.c.l.b16 %v281
    %v865 = vunpack.c.l.b16 %v282
    %v866 = vunpack.c.l.b16 %v283
    %v867 = vunpack.c.l.b16 %v284
    %v868 = vunpack.c.l.b16 %v285
    %v869 = vunpack.c.l.b16 %v286
    %v870 = vunpack.c.l.b16 %v287
    %v871 = vunpack.c.l.b16 %v288
    %v872 = vunpack.c.l.b16 %v289
    %v873 = vunpack.c.l.b16 %v290
    %v874 = vunpack.c.l.b16 %v291
    %v875 = vunpack.c.l.b16 %v292
    %v876 = vunpack.c.l.b16 %v293
    %v877 = vunpack.c.l.b16 %v294
    %v878 = vunpack.c.l.b16 %v295
    %v879 = vunpack.c.l.b16 %v296
    %v880 = vpack.c.b16 %v753, %v752
    %v881 = vpack.c.b16 %v755, %v754
    %v882 = vpack.c.b16 %v757, %v756
    %v883 = vpack.c.b16 %v759, %v758
    %v884 = vpack.c.b16 %v761, %v760
    %v885 = vpack.c.b16 %v763, %v762
    %v886 = vpack.c.b16 %v765, %v764
    %v887 = vpack.c.b16 %v767, %v766
    %v888 = vpack.c.b16 %v769, %v768
    %v889 = vpack.c.b16 %v771, %v770
    %v890 = vpack.c.b16 %v773, %v772
    %v891 = vpack.c.b16 %v775, %v774
    %v892 = vpack.c.b16 %v777, %v776
    %v893 = vpack.c.b16 %v779, %v778
    %v894 = vpack.c.b16 %v781, %v780
    %v895 = vpack.c.b16 %v783, %v782
    %v896 = vpack.c.b16 %v785, %v784
    %v897 = vpack.c.b16 %v787, %v786
    %v898 = vpack.c.b16 %v789, %v788
    %v899 = vpack.c.b16 %v791, %v790
    %v900 = vpack.c.b16 %v793, %v792
    %v901 = vpack.c.b16 %v795, %v794
    %v902 = vpack.c.b16 %v797, %v796
    %v903 = vpack.c.b16 %v799, %v798
    %v904 = vpack.c.b16 %v801, %v800
    %v905 = vpack.c.b16 %v803, %v802
    %v906 = vpack.c.b16 %v805, %v804
    %v907 = vpack.c.b16 %v807, %v806
    %v908 = vpack.c.b16 %v809, %v808
    %v909 = vpack.c.b16 %v811, %v810
    %v910 = vpack.c.b16 %v813, %v812
    %v911 = vpack.c.b16 %v815, %v814
    %v912 = vpack.c.b16 %v817, %v816
    %v913 = vpack.c.b16 %v819, %v818
    %v914 = vpack.c.b16 %v821, %v820
    %v915 = vpack.c.b16 %v823, %v822
    %v916 = vpack.c.b16 %v825, %v824
    %v917 = vpack.c.b16 %v827, %v826
    %v918 = vpack.c.b16 %v829, %v828
    %v919 = vpack.c.b16 %v831, %v830
    %v920 = vpack.c.b16 %v833, %v832
    %v921 = vpack.c.b16 %v835, %v834
    %v922 = vpack.c.b16 %v837, %v836
    %v923 = vpack.c.b16 %v839, %v838
    %v924 = vpack.c.b16 %v841, %v840
    %v925 = vpack.c.b16 %v843, %v842
    %v926 = vpack.c.b16 %v845, %v844
    %v927 = vpack.c.b16 %v847, %v846
    %v928 = vpack.c.b16 %v849, %v848
    %v929 = vpack.c.b16 %v851, %v850
    %v930 = vpack.c.b16 %v853, %v852
    %v931 = vpack.c.b16 %v855, %v854
    %v932 = vpack.c.b16 %v857, %v856
    %v933 = vpack.c.b16 %v859, %v858
    %v934 = vpack.c.b16 %v861, %v860
    %v935 = vpack.c.b16 %v863, %v862
    %v936 = vpack.c.b16 %v865, %v864
    %v937 = vpack.c.b16 %v867, %v866
    %v938 = vpack.c.b16 %v869, %v868
    %v939 = vpack.c.b16 %v871, %v870
    %v940 = vpack.c.b16 %v873, %v872
    %v941 = vpack.c.b16 %v875, %v874
    %v942 = vpack.c.b16 %v877, %v876
    %v943 = vpack.c.b16 %v879, %v878
    %1008 = vmatprep.subr.bf16.mxu0 0
    %1009 = vmatpush1.bf16.msra.mxu0 %v880
    %1010 = vmatprep.subr.bf16.mxu0 0
    %1011 = vmatpush1.bf16.msra.mxu0 %v881
    %1012 = vmatprep.subr.bf16.mxu0 0
    %1013 = vmatpush1.bf16.msra.mxu0 %v882
    %1014 = vmatprep.subr.bf16.mxu0 0
    %1015 = vmatpush1.bf16.msra.mxu0 %v883
    %1016 = vmatprep.subr.bf16.mxu0 0
    %1017 = vmatpush1.bf16.msra.mxu0 %v884
    %1018 = vmatprep.subr.bf16.mxu0 0
    %1019 = vmatpush1.bf16.msra.mxu0 %v885
    %1020 = vmatprep.subr.bf16.mxu0 0
    %1021 = vmatpush1.bf16.msra.mxu0 %v886
    %1022 = vmatprep.subr.bf16.mxu0 0
    %1023 = vmatpush1.bf16.msra.mxu0 %v887
    %1024 = vmatprep.subr.bf16.mxu0 0
    %1025 = vmatpush1.bf16.msra.mxu0 %v888
    %1026 = vmatprep.subr.bf16.mxu0 0
    %1027 = vmatpush1.bf16.msra.mxu0 %v889
    %1028 = vmatprep.subr.bf16.mxu0 0
    %1029 = vmatpush1.bf16.msra.mxu0 %v890
    %1030 = vmatprep.subr.bf16.mxu0 0
    %1031 = vmatpush1.bf16.msra.mxu0 %v891
    %1032 = vmatprep.subr.bf16.mxu0 0
    %1033 = vmatpush1.bf16.msra.mxu0 %v892
    %1034 = vmatprep.subr.bf16.mxu0 0
    %1035 = vmatpush1.bf16.msra.mxu0 %v893
    %1036 = vmatprep.subr.bf16.mxu0 0
    %1037 = vmatpush1.bf16.msra.mxu0 %v894
    %1038 = vmatprep.subr.bf16.mxu0 0
    %1039 = vmatpush1.bf16.msra.mxu0 %v895
    %1040 = vmatprep.mubr.bf16.mxu0 %v497
    %1041 = vmatmul.mubr.bf16.gmra.mrb[0].mxu0 %v496
    %v1042 = vpop.f32.mrb[0].mxu0
    %v1043 = vadd.f32 %v302, %v1042
    %v1044 = vpop.f32.mrb[0].mxu0
    %v1045 = vpop.f32.mrb[0].mxu0
    %v1046 = vadd.f32 %v302, %v1045
    %v1047 = vpop.f32.mrb[0].mxu0
    %1048 = vmatprep.mubr.bf16.mxu0 %v505
    %1049 = vmatmul.mubr.bf16.gmra.mrb[0].mxu0 %v504
    %v1050 = vpop.f32.mrb[0].mxu0
    %v1051 = vadd.f32 %v302, %v1050
    %v1052 = vpop.f32.mrb[0].mxu0
    %v1053 = vpop.f32.mrb[0].mxu0
    %v1054 = vadd.f32 %v302, %v1053
    %v1055 = vpop.f32.mrb[0].mxu0
    %1056 = vmatprep.mubr.bf16.mxu0 %v513
    %1057 = vmatmul.mubr.bf16.gmra.mrb[0].mxu0 %v512
    %v1058 = vpop.f32.mrb[0].mxu0
    %v1059 = vadd.f32 %v302, %v1058
    %v1060 = vpop.f32.mrb[0].mxu0
    %v1061 = vpop.f32.mrb[0].mxu0
    %v1062 = vadd.f32 %v302, %v1061
    %v1063 = vpop.f32.mrb[0].mxu0
    %1064 = vmatprep.mubr.bf16.mxu0 %v521
    %1065 = vmatmul.mubr.bf16.gmra.mrb[0].mxu0 %v520
    %v1066 = vpop.f32.mrb[0].mxu0
    %v1067 = vadd.f32 %v302, %v1066
    %v1068 = vpop.f32.mrb[0].mxu0
    %v1069 = vpop.f32.mrb[0].mxu0
    %v1070 = vadd.f32 %v302, %v1069
    %v1071 = vpop.f32.mrb[0].mxu0
    %1072 = vmatprep.mubr.bf16.mxu0 %v529
    %1073 = vmatmul.mubr.bf16.gmra.mrb[0].mxu0 %v528
    %v1074 = vpop.f32.mrb[0].mxu0
    %v1075 = vadd.f32 %v302, %v1074
    %v1076 = vpop.f32.mrb[0].mxu0
    %v1077 = vpop.f32.mrb[0].mxu0
    %v1078 = vadd.f32 %v302, %v1077
    %v1079 = vpop.f32.mrb[0].mxu0
    %1080 = vmatprep.mubr.bf16.mxu0 %v537
    %1081 = vmatmul.mubr.bf16.gmra.mrb[0].mxu0 %v536
    %v1082 = vpop.f32.mrb[0].mxu0
    %v1083 = vadd.f32 %v302, %v1082
    %v1084 = vpop.f32.mrb[0].mxu0
    %v1085 = vpop.f32.mrb[0].mxu0
    %v1086 = vadd.f32 %v302, %v1085
    %v1087 = vpop.f32.mrb[0].mxu0
    %1088 = vmatprep.mubr.bf16.mxu0 %v545
    %1089 = vmatmul.mubr.bf16.gmra.mrb[0].mxu0 %v544
    %v1090 = vpop.f32.mrb[0].mxu0
    %v1091 = vadd.f32 %v302, %v1090
    %v1092 = vpop.f32.mrb[0].mxu0
    %v1093 = vpop.f32.mrb[0].mxu0
    %v1094 = vadd.f32 %v302, %v1093
    %v1095 = vpop.f32.mrb[0].mxu0
    %1096 = vmatprep.mubr.bf16.mxu0 %v553
    %1097 = vmatmul.mubr.bf16.gmra.mrb[0].mxu0 %v552
    %v1098 = vpop.f32.mrb[0].mxu0
    %v1099 = vadd.f32 %v302, %v1098
    %v1100 = vpop.f32.mrb[0].mxu0
    %v1101 = vpop.f32.mrb[0].mxu0
    %v1102 = vadd.f32 %v302, %v1101
    %v1103 = vpop.f32.mrb[0].mxu0
    %1104 = vdwg.mxu0
    %1105 = vmatprep.subr.bf16.mxu0 0
    %1106 = vmatpush1.bf16.msra.mxu0 %v896
    %1107 = vmatprep.subr.bf16.mxu0 0
    %1108 = vmatpush1.bf16.msra.mxu0 %v897
    %1109 = vmatprep.subr.bf16.mxu0 0
    %1110 = vmatpush1.bf16.msra.mxu0 %v898
    %1111 = vmatprep.subr.bf16.mxu0 0
    %1112 = vmatpush1.bf16.msra.mxu0 %v899
    %1113 = vmatprep.subr.bf16.mxu0 0
    %1114 = vmatpush1.bf16.msra.mxu0 %v900
    %1115 = vmatprep.subr.bf16.mxu0 0
    %1116 = vmatpush1.bf16.msra.mxu0 %v901
    %1117 = vmatprep.subr.bf16.mxu0 0
    %1118 = vmatpush1.bf16.msra.mxu0 %v902
    %1119 = vmatprep.subr.bf16.mxu0 0
    %1120 = vmatpush1.bf16.msra.mxu0 %v903
    %1121 = vmatprep.subr.bf16.mxu0 0
    %1122 = vmatpush1.bf16.msra.mxu0 %v904
    %1123 = vmatprep.subr.bf16.mxu0 0
    %1124 = vmatpush1.bf16.msra.mxu0 %v905
    %1125 = vmatprep.subr.bf16.mxu0 0
    %1126 = vmatpush1.bf16.msra.mxu0 %v906
    %1127 = vmatprep.subr.bf16.mxu0 0
    %1128 = vmatpush1.bf16.msra.mxu0 %v907
    %1129 = vmatprep.subr.bf16.mxu0 0
    %1130 = vmatpush1.bf16.msra.mxu0 %v908
    %1131 = vmatprep.subr.bf16.mxu0 0
    %1132 = vmatpush1.bf16.msra.mxu0 %v909
    %1133 = vmatprep.subr.bf16.mxu0 0
    %1134 = vmatpush1.bf16.msra.mxu0 %v910
    %1135 = vmatprep.subr.bf16.mxu0 0
    %1136 = vmatpush1.bf16.msra.mxu0 %v911
    %1137 = vmatprep.mubr.bf16.mxu0 %v499
    %1138 = vmatmul.mubr.bf16.gmra.mrb[0].mxu0 %v498
    %v1139 = vpop.f32.mrb[0].mxu0
    %v1140 = vadd.f32 %v1043, %v1139
    %v1141 = vpop.f32.mrb[0].mxu0
    %v1142 = vpop.f32.mrb[0].mxu0
    %v1143 = vadd.f32 %v1046, %v1142
    %v1144 = vpop.f32.mrb[0].mxu0
    %1145 = vmatprep.mubr.bf16.mxu0 %v507
    %1146 = vmatmul.mubr.bf16.gmra.mrb[0].mxu0 %v506
    %v1147 = vpop.f32.mrb[0].mxu0
    %v1148 = vadd.f32 %v1051, %v1147
    %v1149 = vpop.f32.mrb[0].mxu0
    %v1150 = vpop.f32.mrb[0].mxu0
    %v1151 = vadd.f32 %v1054, %v1150
    %v1152 = vpop.f32.mrb[0].mxu0
    %1153 = vmatprep.mubr.bf16.mxu0 %v515
    %1154 = vmatmul.mubr.bf16.gmra.mrb[0].mxu0 %v514
    %v1155 = vpop.f32.mrb[0].mxu0
    %v1156 = vadd.f32 %v1059, %v1155
    %v1157 = vpop.f32.mrb[0].mxu0
    %v1158 = vpop.f32.mrb[0].mxu0
    %v1159 = vadd.f32 %v1062, %v1158
    %v1160 = vpop.f32.mrb[0].mxu0
    %1161 = vmatprep.mubr.bf16.mxu0 %v523
    %1162 = vmatmul.mubr.bf16.gmra.mrb[0].mxu0 %v522
    %v1163 = vpop.f32.mrb[0].mxu0
    %v1164 = vadd.f32 %v1067, %v1163
    %v1165 = vpop.f32.mrb[0].mxu0
    %v1166 = vpop.f32.mrb[0].mxu0
    %v1167 = vadd.f32 %v1070, %v1166
    %v1168 = vpop.f32.mrb[0].mxu0
    %1169 = vmatprep.mubr.bf16.mxu0 %v531
    %1170 = vmatmul.mubr.bf16.gmra.mrb[0].mxu0 %v530
    %v1171 = vpop.f32.mrb[0].mxu0
    %v1172 = vadd.f32 %v1075, %v1171
    %v1173 = vpop.f32.mrb[0].mxu0
    %v1174 = vpop.f32.mrb[0].mxu0
    %v1175 = vadd.f32 %v1078, %v1174
    %v1176 = vpop.f32.mrb[0].mxu0
    %1177 = vmatprep.mubr.bf16.mxu0 %v539
    %1178 = vmatmul.mubr.bf16.gmra.mrb[0].mxu0 %v538
    %v1179 = vpop.f32.mrb[0].mxu0
    %v1180 = vadd.f32 %v1083, %v1179
    %v1181 = vpop.f32.mrb[0].mxu0
    %v1182 = vpop.f32.mrb[0].mxu0
    %v1183 = vadd.f32 %v1086, %v1182
    %v1184 = vpop.f32.mrb[0].mxu0
    %1185 = vmatprep.mubr.bf16.mxu0 %v547
    %1186 = vmatmul.mubr.bf16.gmra.mrb[0].mxu0 %v546
    %v1187 = vpop.f32.mrb[0].mxu0
    %v1188 = vadd.f32 %v1091, %v1187
    %v1189 = vpop.f32.mrb[0].mxu0
    %v1190 = vpop.f32.mrb[0].mxu0
    %v1191 = vadd.f32 %v1094, %v1190
    %v1192 = vpop.f32.mrb[0].mxu0
    %1193 = vmatprep.mubr.bf16.mxu0 %v555
    %1194 = vmatmul.mubr.bf16.gmra.mrb[0].mxu0 %v554
    %v1195 = vpop.f32.mrb[0].mxu0
    %v1196 = vadd.f32 %v1099, %v1195
    %v1197 = vpop.f32.mrb[0].mxu0
    %v1198 = vpop.f32.mrb[0].mxu0
    %v1199 = vadd.f32 %v1102, %v1198
    %v1200 = vpop.f32.mrb[0].mxu0
    %1201 = vdwg.mxu0
    %1202 = vmatprep.subr.bf16.mxu0 0
    %1203 = vmatpush1.bf16.msra.mxu0 %v912
    %1204 = vmatprep.subr.bf16.mxu0 0
    %1205 = vmatpush1.bf16.msra.mxu0 %v913
    %1206 = vmatprep.subr.bf16.mxu0 0
    %1207 = vmatpush1.bf16.msra.mxu0 %v914
    %1208 = vmatprep.subr.bf16.mxu0 0
    %1209 = vmatpush1.bf16.msra.mxu0 %v915
    %1210 = vmatprep.subr.bf16.mxu0 0
    %1211 = vmatpush1.bf16.msra.mxu0 %v916
    %1212 = vmatprep.subr.bf16.mxu0 0
    %1213 = vmatpush1.bf16.msra.mxu0 %v917
    %1214 = vmatprep.subr.bf16.mxu0 0
    %1215 = vmatpush1.bf16.msra.mxu0 %v918
    %1216 = vmatprep.subr.bf16.mxu0 0
    %1217 = vmatpush1.bf16.msra.mxu0 %v919
    %1218 = vmatprep.subr.bf16.mxu0 0
    %1219 = vmatpush1.bf16.msra.mxu0 %v920
    %1220 = vmatprep.subr.bf16.mxu0 0
    %1221 = vmatpush1.bf16.msra.mxu0 %v921
    %1222 = vmatprep.subr.bf16.mxu0 0
    %1223 = vmatpush1.bf16.msra.mxu0 %v922
    %1224 = vmatprep.subr.bf16.mxu0 0
    %1225 = vmatpush1.bf16.msra.mxu0 %v923
    %1226 = vmatprep.subr.bf16.mxu0 0
    %1227 = vmatpush1.bf16.msra.mxu0 %v924
    %1228 = vmatprep.subr.bf16.mxu0 0
    %1229 = vmatpush1.bf16.msra.mxu0 %v925
    %1230 = vmatprep.subr.bf16.mxu0 0
    %1231 = vmatpush1.bf16.msra.mxu0 %v926
    %1232 = vmatprep.subr.bf16.mxu0 0
    %1233 = vmatpush1.bf16.msra.mxu0 %v927
    %1234 = vmatprep.mubr.bf16.mxu0 %v501
    %1235 = vmatmul.mubr.bf16.gmra.mrb[0].mxu0 %v500
    %v1236 = vpop.f32.mrb[0].mxu0
    %v1237 = vadd.f32 %v1140, %v1236
    %v1238 = vpop.f32.mrb[0].mxu0
    %v1239 = vpop.f32.mrb[0].mxu0
    %v1240 = vadd.f32 %v1143, %v1239
    %v1241 = vpop.f32.mrb[0].mxu0
    %1242 = vmatprep.mubr.bf16.mxu0 %v509
    %1243 = vmatmul.mubr.bf16.gmra.mrb[0].mxu0 %v508
    %v1244 = vpop.f32.mrb[0].mxu0
    %v1245 = vadd.f32 %v1148, %v1244
    %v1246 = vpop.f32.mrb[0].mxu0
    %v1247 = vpop.f32.mrb[0].mxu0
    %v1248 = vadd.f32 %v1151, %v1247
    %v1249 = vpop.f32.mrb[0].mxu0
    %1250 = vmatprep.mubr.bf16.mxu0 %v517
    %1251 = vmatmul.mubr.bf16.gmra.mrb[0].mxu0 %v516
    %v1252 = vpop.f32.mrb[0].mxu0
    %v1253 = vadd.f32 %v1156, %v1252
    %v1254 = vpop.f32.mrb[0].mxu0
    %v1255 = vpop.f32.mrb[0].mxu0
    %v1256 = vadd.f32 %v1159, %v1255
    %v1257 = vpop.f32.mrb[0].mxu0
    %1258 = vmatprep.mubr.bf16.mxu0 %v525
    %1259 = vmatmul.mubr.bf16.gmra.mrb[0].mxu0 %v524
    %v1260 = vpop.f32.mrb[0].mxu0
    %v1261 = vadd.f32 %v1164, %v1260
    %v1262 = vpop.f32.mrb[0].mxu0
    %v1263 = vpop.f32.mrb[0].mxu0
    %v1264 = vadd.f32 %v1167, %v1263
    %v1265 = vpop.f32.mrb[0].mxu0
    %1266 = vmatprep.mubr.bf16.mxu0 %v533
    %1267 = vmatmul.mubr.bf16.gmra.mrb[0].mxu0 %v532
    %v1268 = vpop.f32.mrb[0].mxu0
    %v1269 = vadd.f32 %v1172, %v1268
    %v1270 = vpop.f32.mrb[0].mxu0
    %v1271 = vpop.f32.mrb[0].mxu0
    %v1272 = vadd.f32 %v1175, %v1271
    %v1273 = vpop.f32.mrb[0].mxu0
    %1274 = vmatprep.mubr.bf16.mxu0 %v541
    %1275 = vmatmul.mubr.bf16.gmra.mrb[0].mxu0 %v540
    %v1276 = vpop.f32.mrb[0].mxu0
    %v1277 = vadd.f32 %v1180, %v1276
    %v1278 = vpop.f32.mrb[0].mxu0
    %v1279 = vpop.f32.mrb[0].mxu0
    %v1280 = vadd.f32 %v1183, %v1279
    %v1281 = vpop.f32.mrb[0].mxu0
    %1282 = vmatprep.mubr.bf16.mxu0 %v549
    %1283 = vmatmul.mubr.bf16.gmra.mrb[0].mxu0 %v548
    %v1284 = vpop.f32.mrb[0].mxu0
    %v1285 = vadd.f32 %v1188, %v1284
    %v1286 = vpop.f32.mrb[0].mxu0
    %v1287 = vpop.f32.mrb[0].mxu0
    %v1288 = vadd.f32 %v1191, %v1287
    %v1289 = vpop.f32.mrb[0].mxu0
    %1290 = vmatprep.mubr.bf16.mxu0 %v557
    %1291 = vmatmul.mubr.bf16.gmra.mrb[0].mxu0 %v556
    %v1292 = vpop.f32.mrb[0].mxu0
    %v1293 = vadd.f32 %v1196, %v1292
    %v1294 = vpop.f32.mrb[0].mxu0
    %v1295 = vpop.f32.mrb[0].mxu0
    %v1296 = vadd.f32 %v1199, %v1295
    %v1297 = vpop.f32.mrb[0].mxu0
    %1298 = vdwg.mxu0
    %1299 = vmatprep.subr.bf16.mxu0 0
    %1300 = vmatpush1.bf16.msra.mxu0 %v928
    %1301 = vmatprep.subr.bf16.mxu0 0
    %1302 = vmatpush1.bf16.msra.mxu0 %v929
    %1303 = vmatprep.subr.bf16.mxu0 0
    %1304 = vmatpush1.bf16.msra.mxu0 %v930
    %1305 = vmatprep.subr.bf16.mxu0 0
    %1306 = vmatpush1.bf16.msra.mxu0 %v931
    %1307 = vmatprep.subr.bf16.mxu0 0
    %1308 = vmatpush1.bf16.msra.mxu0 %v932
    %1309 = vmatprep.subr.bf16.mxu0 0
    %1310 = vmatpush1.bf16.msra.mxu0 %v933
    %1311 = vmatprep.subr.bf16.mxu0 0
    %1312 = vmatpush1.bf16.msra.mxu0 %v934
    %1313 = vmatprep.subr.bf16.mxu0 0
    %1314 = vmatpush1.bf16.msra.mxu0 %v935
    %1315 = vmatprep.subr.bf16.mxu0 0
    %1316 = vmatpush1.bf16.msra.mxu0 %v936
    %1317 = vmatprep.subr.bf16.mxu0 0
    %1318 = vmatpush1.bf16.msra.mxu0 %v937
    %1319 = vmatprep.subr.bf16.mxu0 0
    %1320 = vmatpush1.bf16.msra.mxu0 %v938
    %1321 = vmatprep.subr.bf16.mxu0 0
    %1322 = vmatpush1.bf16.msra.mxu0 %v939
    %1323 = vmatprep.subr.bf16.mxu0 0
    %1324 = vmatpush1.bf16.msra.mxu0 %v940
    %1325 = vmatprep.subr.bf16.mxu0 0
    %1326 = vmatpush1.bf16.msra.mxu0 %v941
    %1327 = vmatprep.subr.bf16.mxu0 0
    %1328 = vmatpush1.bf16.msra.mxu0 %v942
    %1329 = vmatprep.subr.bf16.mxu0 0
    %1330 = vmatpush1.bf16.msra.mxu0 %v943
    %1331 = vmatprep.mubr.bf16.mxu0 %v503
    %1332 = vmatmul.mubr.bf16.gmra.mrb[0].mxu0 %v502
    %v1333 = vpop.f32.mrb[0].mxu0
    %v1334 = vadd.f32 %v1237, %v1333
    %v1335 = vpop.f32.mrb[0].mxu0
    %v1336 = vpop.f32.mrb[0].mxu0
    %v1337 = vadd.f32 %v1240, %v1336
    %v1338 = vpop.f32.mrb[0].mxu0
    %1339 = vmatprep.mubr.bf16.mxu0 %v511
    %1340 = vmatmul.mubr.bf16.gmra.mrb[0].mxu0 %v510
    %v1341 = vpop.f32.mrb[0].mxu0
    %v1342 = vadd.f32 %v1245, %v1341
    %v1343 = vpop.f32.mrb[0].mxu0
    %v1344 = vpop.f32.mrb[0].mxu0
    %v1345 = vadd.f32 %v1248, %v1344
    %v1346 = vpop.f32.mrb[0].mxu0
    %1347 = vmatprep.mubr.bf16.mxu0 %v519
    %1348 = vmatmul.mubr.bf16.gmra.mrb[0].mxu0 %v518
    %v1349 = vpop.f32.mrb[0].mxu0
    %v1350 = vadd.f32 %v1253, %v1349
    %v1351 = vpop.f32.mrb[0].mxu0
    %v1352 = vpop.f32.mrb[0].mxu0
    %v1353 = vadd.f32 %v1256, %v1352
    %v1354 = vpop.f32.mrb[0].mxu0
    %1355 = vmatprep.mubr.bf16.mxu0 %v527
    %1356 = vmatmul.mubr.bf16.gmra.mrb[0].mxu0 %v526
    %v1357 = vpop.f32.mrb[0].mxu0
    %v1358 = vadd.f32 %v1261, %v1357
    %v1359 = vpop.f32.mrb[0].mxu0
    %v1360 = vpop.f32.mrb[0].mxu0
    %v1361 = vadd.f32 %v1264, %v1360
    %v1362 = vpop.f32.mrb[0].mxu0
    %1363 = vmatprep.mubr.bf16.mxu0 %v535
    %1364 = vmatmul.mubr.bf16.gmra.mrb[0].mxu0 %v534
    %v1365 = vpop.f32.mrb[0].mxu0
    %v1366 = vadd.f32 %v1269, %v1365
    %v1367 = vpop.f32.mrb[0].mxu0
    %v1368 = vpop.f32.mrb[0].mxu0
    %v1369 = vadd.f32 %v1272, %v1368
    %v1370 = vpop.f32.mrb[0].mxu0
    %1371 = vmatprep.mubr.bf16.mxu0 %v543
    %1372 = vmatmul.mubr.bf16.gmra.mrb[0].mxu0 %v542
    %v1373 = vpop.f32.mrb[0].mxu0
    %v1374 = vadd.f32 %v1277, %v1373
    %v1375 = vpop.f32.mrb[0].mxu0
    %v1376 = vpop.f32.mrb[0].mxu0
    %v1377 = vadd.f32 %v1280, %v1376
    %v1378 = vpop.f32.mrb[0].mxu0
    %1379 = vmatprep.mubr.bf16.mxu0 %v551
    %1380 = vmatmul.mubr.bf16.gmra.mrb[0].mxu0 %v550
    %v1381 = vpop.f32.mrb[0].mxu0
    %v1382 = vadd.f32 %v1285, %v1381
    %v1383 = vpop.f32.mrb[0].mxu0
    %v1384 = vpop.f32.mrb[0].mxu0
    %v1385 = vadd.f32 %v1288, %v1384
    %v1386 = vpop.f32.mrb[0].mxu0
    %1387 = vmatprep.mubr.bf16.mxu0 %v559
    %1388 = vmatmul.mubr.bf16.gmra.mrb[0].mxu0 %v558
    %v1389 = vpop.f32.mrb[0].mxu0
    %v1390 = vadd.f32 %v1293, %v1389
    %v1391 = vpop.f32.mrb[0].mxu0
    %v1392 = vpop.f32.mrb[0].mxu0
    %v1393 = vadd.f32 %v1296, %v1392
    %v1394 = vpop.f32.mrb[0].mxu0
    %1395 = vdwg.mxu0
    %v1396 = vmax.f32 %v1334, 0.0
    %v1397 = vmax.f32 %v1337, 0.0
    %v1398 = vmax.f32 %v1342, 0.0
    %v1399 = vmax.f32 %v1345, 0.0
    %v1400 = vmax.f32 %v1350, 0.0
    %v1401 = vmax.f32 %v1353, 0.0
    %v1402 = vmax.f32 %v1358, 0.0
    %v1403 = vmax.f32 %v1361, 0.0
    %v1404 = vmax.f32 %v1366, 0.0
    %v1405 = vmax.f32 %v1369, 0.0
    %v1406 = vmax.f32 %v1374, 0.0
    %v1407 = vmax.f32 %v1377, 0.0
    %v1408 = vmax.f32 %v1382, 0.0
    %v1409 = vmax.f32 %v1385, 0.0
    %v1410 = vmax.f32 %v1390, 0.0
    %v1411 = vmax.f32 %v1393, 0.0
    %v1412 = vpack.c.bf16 %v1397, %v1396
    %v1413 = vpack.c.bf16 %v1399, %v1398
    %v1414 = vpack.c.bf16 %v1401, %v1400
    %v1415 = vpack.c.bf16 %v1403, %v1402
    %v1416 = vpack.c.bf16 %v1405, %v1404
    %v1417 = vpack.c.bf16 %v1407, %v1406
    %v1418 = vpack.c.bf16 %v1409, %v1408
    %v1419 = vpack.c.bf16 %v1411, %v1410
    %v1420 = vld [vmem:[#allocation7] sm:$0xf]
    %v1421 = vld [vmem:[#allocation7 + $0x4] sm:$0xf]
    %v1422 = vld [vmem:[#allocation7 + $0x8] sm:$0xf]
    %v1423 = vld [vmem:[#allocation7 + $0xc] sm:$0xf]
    %v1424 = vld [vmem:[#allocation7 + $0x10] sm:$0xf]
    %v1425 = vld [vmem:[#allocation7 + $0x14] sm:$0xf]
    %v1426 = vld [vmem:[#allocation7 + $0x18] sm:$0xf]
    %v1427 = vld [vmem:[#allocation7 + $0x1c] sm:$0xf]
    %v1428 = vld [vmem:[#allocation7 + $0x20] sm:$0xf]
    %v1429 = vld [vmem:[#allocation7 + $0x24] sm:$0xf]
    %v1430 = vld [vmem:[#allocation7 + $0x28] sm:$0xf]
    %v1431 = vld [vmem:[#allocation7 + $0x2c] sm:$0xf]
    %v1432 = vld [vmem:[#allocation7 + $0x30] sm:$0xf]
    %v1433 = vld [vmem:[#allocation7 + $0x34] sm:$0xf]
    %v1434 = vld [vmem:[#allocation7 + $0x38] sm:$0xf]
    %v1435 = vld [vmem:[#allocation7 + $0x3c] sm:$0xf]
    %v1436 = vld [vmem:[%s4] sm:$0x1]
    %v1438 = vlaneseq
    %v1439 = vshrl.u32 %v1438, 7
    %v1440 = vsub.s32 0, %v1439
    %v1441 = vrot.slane %v1436, %v1440
    %v1459 = vunpack.c.l.b16 %v1420
    %v1460 = vunpack.c.l.b16 %v1421
    %v1461 = vunpack.c.l.b16 %v1422
    %v1462 = vunpack.c.l.b16 %v1423
    %v1463 = vunpack.c.l.b16 %v1424
    %v1464 = vunpack.c.l.b16 %v1425
    %v1465 = vunpack.c.l.b16 %v1426
    %v1466 = vunpack.c.l.b16 %v1427
    %v1467 = vunpack.c.l.b16 %v1428
    %v1468 = vunpack.c.l.b16 %v1429
    %v1469 = vunpack.c.l.b16 %v1430
    %v1470 = vunpack.c.l.b16 %v1431
    %v1471 = vunpack.c.l.b16 %v1432
    %v1472 = vunpack.c.l.b16 %v1433
    %v1473 = vunpack.c.l.b16 %v1434
    %v1474 = vunpack.c.l.b16 %v1435
    %v1475 = vpack.c.b16 %v1460, %v1459
    %v1476 = vpack.c.b16 %v1462, %v1461
    %v1477 = vpack.c.b16 %v1464, %v1463
    %v1478 = vpack.c.b16 %v1466, %v1465
    %v1479 = vpack.c.b16 %v1468, %v1467
    %v1480 = vpack.c.b16 %v1470, %v1469
    %v1481 = vpack.c.b16 %v1472, %v1471
    %v1482 = vpack.c.b16 %v1474, %v1473
    %1491 = vmatprep.subr.bf16.mxu0 0
    %1492 = vmatpush1.bf16.msra.mxu0 %v1475
    %1493 = vmatprep.subr.bf16.mxu0 0
    %1494 = vmatpush1.bf16.msra.mxu0 %v1476
    %1495 = vmatprep.subr.bf16.mxu0 0
    %1496 = vmatpush1.bf16.msra.mxu0 %v1477
    %1497 = vmatprep.subr.bf16.mxu0 0
    %1498 = vmatpush1.bf16.msra.mxu0 %v1478
    %1499 = vmatprep.subr.bf16.mxu0 0
    %1500 = vmatpush1.bf16.msra.mxu0 %v1479
    %1501 = vmatprep.subr.bf16.mxu0 0
    %1502 = vmatpush1.bf16.msra.mxu0 %v1480
    %1503 = vmatprep.subr.bf16.mxu0 0
    %1504 = vmatpush1.bf16.msra.mxu0 %v1481
    %1505 = vmatprep.subr.bf16.mxu0 0
    %1506 = vmatpush1.bf16.msra.mxu0 %v1482
    %1507 = vmatprep.subr.bf16.mxu0 0
    %1508 = vmatpush1.bf16.msra.mxu0 0
    %1509 = vmatprep.subr.bf16.mxu0 0
    %1510 = vmatpush1.bf16.msra.mxu0 0
    %1511 = vmatprep.subr.bf16.mxu0 0
    %1512 = vmatpush1.bf16.msra.mxu0 0
    %1513 = vmatprep.subr.bf16.mxu0 0
    %1514 = vmatpush1.bf16.msra.mxu0 0
    %1515 = vmatprep.subr.bf16.mxu0 0
    %1516 = vmatpush1.bf16.msra.mxu0 0
    %1517 = vmatprep.subr.bf16.mxu0 0
    %1518 = vmatpush1.bf16.msra.mxu0 0
    %1519 = vmatprep.subr.bf16.mxu0 0
    %1520 = vmatpush1.bf16.msra.mxu0 0
    %1521 = vmatprep.subr.bf16.mxu0 0
    %1522 = vmatpush1.bf16.msra.mxu0 0
    %1523 = vmatprep.mubr.bf16.mxu0 0
    %1524 = vmatmul.mubr.bf16.gmra.mrb[0].mxu0 %v1412
    %v1525 = vpop.f32.mrb[0].mxu0
    %v1526 = vadd.f32 %v1441, %v1525
    %v1527 = vpop.f32.mrb[0].mxu0
    %v1528 = vpop.f32.mrb[0].mxu0
    %v1529 = vadd.f32 %v1441, %v1528
    %v1530 = vpop.f32.mrb[0].mxu0
    %1531 = vmatprep.mubr.bf16.mxu0 0
    %1532 = vmatmul.mubr.bf16.gmra.mrb[0].mxu0 %v1413
    %v1533 = vpop.f32.mrb[0].mxu0
    %v1534 = vadd.f32 %v1441, %v1533
    %v1535 = vpop.f32.mrb[0].mxu0
    %v1536 = vpop.f32.mrb[0].mxu0
    %v1537 = vadd.f32 %v1441, %v1536
    %v1538 = vpop.f32.mrb[0].mxu0
    %1539 = vmatprep.mubr.bf16.mxu0 0
    %1540 = vmatmul.mubr.bf16.gmra.mrb[0].mxu0 %v1414
    %v1541 = vpop.f32.mrb[0].mxu0
    %v1542 = vadd.f32 %v1441, %v1541
    %v1543 = vpop.f32.mrb[0].mxu0
    %v1544 = vpop.f32.mrb[0].mxu0
    %v1545 = vadd.f32 %v1441, %v1544
    %v1546 = vpop.f32.mrb[0].mxu0
    %1547 = vmatprep.mubr.bf16.mxu0 0
    %1548 = vmatmul.mubr.bf16.gmra.mrb[0].mxu0 %v1415
    %v1549 = vpop.f32.mrb[0].mxu0
    %v1550 = vadd.f32 %v1441, %v1549
    %v1551 = vpop.f32.mrb[0].mxu0
    %v1552 = vpop.f32.mrb[0].mxu0
    %v1553 = vadd.f32 %v1441, %v1552
    %v1554 = vpop.f32.mrb[0].mxu0
    %1555 = vmatprep.mubr.bf16.mxu0 0
    %1556 = vmatmul.mubr.bf16.gmra.mrb[0].mxu0 %v1416
    %v1557 = vpop.f32.mrb[0].mxu0
    %v1558 = vadd.f32 %v1441, %v1557
    %v1559 = vpop.f32.mrb[0].mxu0
    %v1560 = vpop.f32.mrb[0].mxu0
    %v1561 = vadd.f32 %v1441, %v1560
    %v1562 = vpop.f32.mrb[0].mxu0
    %1563 = vmatprep.mubr.bf16.mxu0 0
    %1564 = vmatmul.mubr.bf16.gmra.mrb[0].mxu0 %v1417
    %v1565 = vpop.f32.mrb[0].mxu0
    %v1566 = vadd.f32 %v1441, %v1565
    %v1567 = vpop.f32.mrb[0].mxu0
    %v1568 = vpop.f32.mrb[0].mxu0
    %v1569 = vadd.f32 %v1441, %v1568
    %v1570 = vpop.f32.mrb[0].mxu0
    %1571 = vmatprep.mubr.bf16.mxu0 0
    %1572 = vmatmul.mubr.bf16.gmra.mrb[0].mxu0 %v1418
    %v1573 = vpop.f32.mrb[0].mxu0
    %v1574 = vadd.f32 %v1441, %v1573
    %v1575 = vpop.f32.mrb[0].mxu0
    %v1576 = vpop.f32.mrb[0].mxu0
    %v1577 = vadd.f32 %v1441, %v1576
    %v1578 = vpop.f32.mrb[0].mxu0
    %1579 = vmatprep.mubr.bf16.mxu0 0
    %1580 = vmatmul.mubr.bf16.gmra.mrb[0].mxu0 %v1419
    %v1581 = vpop.f32.mrb[0].mxu0
    %v1582 = vadd.f32 %v1441, %v1581
    %v1583 = vpop.f32.mrb[0].mxu0
    %v1584 = vpop.f32.mrb[0].mxu0
    %v1585 = vadd.f32 %v1441, %v1584
    %v1586 = vpop.f32.mrb[0].mxu0
    %1587 = vdwg.mxu0
    %v1588 = vpack.c.bf16 %v1529, %v1526
    %v1589 = vpack.c.bf16 %v1537, %v1534
    %v1590 = vpack.c.bf16 %v1545, %v1542
    %v1591 = vpack.c.bf16 %v1553, %v1550
    %v1592 = vpack.c.bf16 %v1561, %v1558
    %v1593 = vpack.c.bf16 %v1569, %v1566
    %v1594 = vpack.c.bf16 %v1577, %v1574
    %v1595 = vpack.c.bf16 %v1585, %v1582
    %v1596 = vld [vmem:[#allocation8] sm:$0xf]
    %v1597 = vld [vmem:[#allocation8 + $0x4] sm:$0xf]
    %v1598 = vld [vmem:[#allocation8 + $0x8] sm:$0xf]
    %v1599 = vld [vmem:[#allocation8 + $0xc] sm:$0xf]
    %v1600 = vld [vmem:[#allocation8 + $0x10] sm:$0xf]
    %v1601 = vld [vmem:[#allocation8 + $0x14] sm:$0xf]
    %v1602 = vld [vmem:[#allocation8 + $0x18] sm:$0xf]
    %v1603 = vld [vmem:[#allocation8 + $0x1c] sm:$0xf]
    %v1604 = vld [vmem:[#allocation8 + $0x20] sm:$0xf]
    %v1605 = vld [vmem:[#allocation8 + $0x24] sm:$0xf]
    %v1606 = vld [vmem:[#allocation8 + $0x28] sm:$0xf]
    %v1607 = vld [vmem:[#allocation8 + $0x2c] sm:$0xf]
    %v1608 = vld [vmem:[#allocation8 + $0x30] sm:$0xf]
    %v1609 = vld [vmem:[#allocation8 + $0x34] sm:$0xf]
    %v1610 = vld [vmem:[#allocation8 + $0x38] sm:$0xf]
    %v1611 = vld [vmem:[#allocation8 + $0x3c] sm:$0xf]
    %v1612 = vld [vmem:[%s6] sm:$0x1]
    %v1614 = vlaneseq
    %v1615 = vshrl.u32 %v1614, 7
    %v1616 = vsub.s32 0, %v1615
    %v1617 = vrot.slane %v1612, %v1616
    %v1635 = vunpack.c.l.b16 %v1596
    %v1636 = vunpack.c.l.b16 %v1597
    %v1637 = vunpack.c.l.b16 %v1598
    %v1638 = vunpack.c.l.b16 %v1599
    %v1639 = vunpack.c.l.b16 %v1600
    %v1640 = vunpack.c.l.b16 %v1601
    %v1641 = vunpack.c.l.b16 %v1602
    %v1642 = vunpack.c.l.b16 %v1603
    %v1643 = vunpack.c.l.b16 %v1604
    %v1644 = vunpack.c.l.b16 %v1605
    %v1645 = vunpack.c.l.b16 %v1606
    %v1646 = vunpack.c.l.b16 %v1607
    %v1647 = vunpack.c.l.b16 %v1608
    %v1648 = vunpack.c.l.b16 %v1609
    %v1649 = vunpack.c.l.b16 %v1610
    %v1650 = vunpack.c.l.b16 %v1611
    %v1651 = vpack.c.b16 %v1636, %v1635
    %v1652 = vpack.c.b16 %v1638, %v1637
    %v1653 = vpack.c.b16 %v1640, %v1639
    %v1654 = vpack.c.b16 %v1642, %v1641
    %v1655 = vpack.c.b16 %v1644, %v1643
    %v1656 = vpack.c.b16 %v1646, %v1645
    %v1657 = vpack.c.b16 %v1648, %v1647
    %v1658 = vpack.c.b16 %v1650, %v1649
    %1667 = vmatprep.subr.bf16.mxu0 0
    %1668 = vmatpush1.bf16.msra.mxu0 %v1651
    %1669 = vmatprep.subr.bf16.mxu0 0
    %1670 = vmatpush1.bf16.msra.mxu0 %v1652
    %1671 = vmatprep.subr.bf16.mxu0 0
    %1672 = vmatpush1.bf16.msra.mxu0 %v1653
    %1673 = vmatprep.subr.bf16.mxu0 0
    %1674 = vmatpush1.bf16.msra.mxu0 %v1654
    %1675 = vmatprep.subr.bf16.mxu0 0
    %1676 = vmatpush1.bf16.msra.mxu0 %v1655
    %1677 = vmatprep.subr.bf16.mxu0 0
    %1678 = vmatpush1.bf16.msra.mxu0 %v1656
    %1679 = vmatprep.subr.bf16.mxu0 0
    %1680 = vmatpush1.bf16.msra.mxu0 %v1657
    %1681 = vmatprep.subr.bf16.mxu0 0
    %1682 = vmatpush1.bf16.msra.mxu0 %v1658
    %1683 = vmatprep.subr.bf16.mxu0 0
    %1684 = vmatpush1.bf16.msra.mxu0 0
    %1685 = vmatprep.subr.bf16.mxu0 0
    %1686 = vmatpush1.bf16.msra.mxu0 0
    %1687 = vmatprep.subr.bf16.mxu0 0
    %1688 = vmatpush1.bf16.msra.mxu0 0
    %1689 = vmatprep.subr.bf16.mxu0 0
    %1690 = vmatpush1.bf16.msra.mxu0 0
    %1691 = vmatprep.subr.bf16.mxu0 0
    %1692 = vmatpush1.bf16.msra.mxu0 0
    %1693 = vmatprep.subr.bf16.mxu0 0
    %1694 = vmatpush1.bf16.msra.mxu0 0
    %1695 = vmatprep.subr.bf16.mxu0 0
    %1696 = vmatpush1.bf16.msra.mxu0 0
    %1697 = vmatprep.subr.bf16.mxu0 0
    %1698 = vmatpush1.bf16.msra.mxu0 0
    %1699 = vmatprep.mubr.bf16.mxu0 0
    %1700 = vmatmul.mubr.bf16.gmra.mrb[0].mxu0 %v1588
    %v1701 = vpop.f32.mrb[0].mxu0
    %v1702 = vadd.f32 %v1617, %v1701
    %v1703 = vpop.f32.mrb[0].mxu0
    %v1704 = vpop.f32.mrb[0].mxu0
    %v1705 = vadd.f32 %v1617, %v1704
    %v1706 = vpop.f32.mrb[0].mxu0
    %1707 = vmatprep.mubr.bf16.mxu0 0
    %1708 = vmatmul.mubr.bf16.gmra.mrb[0].mxu0 %v1589
    %v1709 = vpop.f32.mrb[0].mxu0
    %v1710 = vadd.f32 %v1617, %v1709
    %v1711 = vpop.f32.mrb[0].mxu0
    %v1712 = vpop.f32.mrb[0].mxu0
    %v1713 = vadd.f32 %v1617, %v1712
    %v1714 = vpop.f32.mrb[0].mxu0
    %1715 = vmatprep.mubr.bf16.mxu0 0
    %1716 = vmatmul.mubr.bf16.gmra.mrb[0].mxu0 %v1590
    %v1717 = vpop.f32.mrb[0].mxu0
    %v1718 = vadd.f32 %v1617, %v1717
    %v1719 = vpop.f32.mrb[0].mxu0
    %v1720 = vpop.f32.mrb[0].mxu0
    %v1721 = vadd.f32 %v1617, %v1720
    %v1722 = vpop.f32.mrb[0].mxu0
    %1723 = vmatprep.mubr.bf16.mxu0 0
    %1724 = vmatmul.mubr.bf16.gmra.mrb[0].mxu0 %v1591
    %v1725 = vpop.f32.mrb[0].mxu0
    %v1726 = vadd.f32 %v1617, %v1725
    %v1727 = vpop.f32.mrb[0].mxu0
    %v1728 = vpop.f32.mrb[0].mxu0
    %v1729 = vadd.f32 %v1617, %v1728
    %v1730 = vpop.f32.mrb[0].mxu0
    %1731 = vmatprep.mubr.bf16.mxu0 0
    %1732 = vmatmul.mubr.bf16.gmra.mrb[0].mxu0 %v1592
    %v1733 = vpop.f32.mrb[0].mxu0
    %v1734 = vadd.f32 %v1617, %v1733
    %v1735 = vpop.f32.mrb[0].mxu0
    %v1736 = vpop.f32.mrb[0].mxu0
    %v1737 = vadd.f32 %v1617, %v1736
    %v1738 = vpop.f32.mrb[0].mxu0
    %1739 = vmatprep.mubr.bf16.mxu0 0
    %1740 = vmatmul.mubr.bf16.gmra.mrb[0].mxu0 %v1593
    %v1741 = vpop.f32.mrb[0].mxu0
    %v1742 = vadd.f32 %v1617, %v1741
    %v1743 = vpop.f32.mrb[0].mxu0
    %v1744 = vpop.f32.mrb[0].mxu0
    %v1745 = vadd.f32 %v1617, %v1744
    %v1746 = vpop.f32.mrb[0].mxu0
    %1747 = vmatprep.mubr.bf16.mxu0 0
    %1748 = vmatmul.mubr.bf16.gmra.mrb[0].mxu0 %v1594
    %v1749 = vpop.f32.mrb[0].mxu0
    %v1750 = vadd.f32 %v1617, %v1749
    %v1751 = vpop.f32.mrb[0].mxu0
    %v1752 = vpop.f32.mrb[0].mxu0
    %v1753 = vadd.f32 %v1617, %v1752
    %v1754 = vpop.f32.mrb[0].mxu0
    %1755 = vmatprep.mubr.bf16.mxu0 0
    %1756 = vmatmul.mubr.bf16.gmra.mrb[0].mxu0 %v1595
    %v1757 = vpop.f32.mrb[0].mxu0
    %v1758 = vadd.f32 %v1617, %v1757
    %v1759 = vpop.f32.mrb[0].mxu0
    %v1760 = vpop.f32.mrb[0].mxu0
    %v1761 = vadd.f32 %v1617, %v1760
    %v1762 = vpop.f32.mrb[0].mxu0
    %1763 = vdwg.mxu0
    %v1764 = vmax.f32 %v1702, 0.0
    %v1765 = vmax.f32 %v1705, 0.0
    %v1766 = vmax.f32 %v1710, 0.0
    %v1767 = vmax.f32 %v1713, 0.0
    %v1768 = vmax.f32 %v1718, 0.0
    %v1769 = vmax.f32 %v1721, 0.0
    %v1770 = vmax.f32 %v1726, 0.0
    %v1771 = vmax.f32 %v1729, 0.0
    %v1772 = vmax.f32 %v1734, 0.0
    %v1773 = vmax.f32 %v1737, 0.0
    %v1774 = vmax.f32 %v1742, 0.0
    %v1775 = vmax.f32 %v1745, 0.0
    %v1776 = vmax.f32 %v1750, 0.0
    %v1777 = vmax.f32 %v1753, 0.0
    %v1778 = vmax.f32 %v1758, 0.0
    %v1779 = vmax.f32 %v1761, 0.0
    %v1780 = vpack.c.bf16 %v1765, %v1764
    %v1781 = vpack.c.bf16 %v1767, %v1766
    %v1782 = vpack.c.bf16 %v1769, %v1768
    %v1783 = vpack.c.bf16 %v1771, %v1770
    %v1784 = vpack.c.bf16 %v1773, %v1772
    %v1785 = vpack.c.bf16 %v1775, %v1774
    %v1786 = vpack.c.bf16 %v1777, %v1776
    %v1787 = vpack.c.bf16 %v1779, %v1778
    %v1788 = vld [vmem:[#allocation10] sm:$0xff]
    %v1789 = vld [vmem:[#allocation10 + $0x8] sm:$0xff]
    %v1790 = vld [vmem:[#allocation10 + $0x10] sm:$0xff]
    %v1791 = vld [vmem:[#allocation10 + $0x18] sm:$0xff]
    %v1792 = vld [vmem:[#allocation10 + $0x20] sm:$0xff]
    %v1793 = vld [vmem:[#allocation10 + $0x28] sm:$0xff]
    %v1794 = vld [vmem:[#allocation10 + $0x30] sm:$0xff]
    %v1795 = vld [vmem:[#allocation10 + $0x38] sm:$0xff]
    %v1796 = vld [vmem:[#allocation10 + $0x40] sm:$0xff]
    %v1797 = vld [vmem:[#allocation10 + $0x48] sm:$0xff]
    %v1798 = vld [vmem:[#allocation10 + $0x50] sm:$0xff]
    %v1799 = vld [vmem:[#allocation10 + $0x58] sm:$0xff]
    %v1800 = vld [vmem:[#allocation10 + $0x60] sm:$0xff]
    %v1801 = vld [vmem:[#allocation10 + $0x68] sm:$0xff]
    %v1802 = vld [vmem:[#allocation10 + $0x70] sm:$0xff]
    %v1803 = vld [vmem:[#allocation10 + $0x78] sm:$0xff]
    %v1804 = vld [vmem:[#allocation10 + $0x80] sm:$0xff]
    %v1805 = vld [vmem:[#allocation10 + $0x88] sm:$0xff]
    %v1806 = vld [vmem:[#allocation10 + $0x90] sm:$0xff]
    %v1807 = vld [vmem:[#allocation10 + $0x98] sm:$0xff]
    %v1808 = vld [vmem:[#allocation10 + $0xa0] sm:$0xff]
    %v1809 = vld [vmem:[#allocation10 + $0xa8] sm:$0xff]
    %v1810 = vld [vmem:[#allocation10 + $0xb0] sm:$0xff]
    %v1811 = vld [vmem:[#allocation10 + $0xb8] sm:$0xff]
    %v1812 = vld [vmem:[#allocation10 + $0xc0] sm:$0xff]
    %v1813 = vld [vmem:[#allocation10 + $0xc8] sm:$0xff]
    %v1814 = vld [vmem:[#allocation10 + $0xd0] sm:$0xff]
    %v1815 = vld [vmem:[#allocation10 + $0xd8] sm:$0xff]
    %v1816 = vld [vmem:[#allocation10 + $0xe0] sm:$0xff]
    %v1817 = vld [vmem:[#allocation10 + $0xe8] sm:$0xff]
    %v1818 = vld [vmem:[#allocation10 + $0xf0] sm:$0xff]
    %v1819 = vld [vmem:[#allocation10 + $0xf8] sm:$0xff]
    %v1820 = vld [vmem:[#allocation10 + $0x100] sm:$0xff]
    %v1821 = vld [vmem:[#allocation10 + $0x108] sm:$0xff]
    %v1822 = vld [vmem:[#allocation10 + $0x110] sm:$0xff]
    %v1823 = vld [vmem:[#allocation10 + $0x118] sm:$0xff]
    %v1824 = vld [vmem:[#allocation10 + $0x120] sm:$0xff]
    %v1825 = vld [vmem:[#allocation10 + $0x128] sm:$0xff]
    %v1826 = vld [vmem:[#allocation10 + $0x130] sm:$0xff]
    %v1827 = vld [vmem:[#allocation10 + $0x138] sm:$0xff]
    %v1828 = vld [vmem:[#allocation10 + $0x140] sm:$0xff]
    %v1829 = vld [vmem:[#allocation10 + $0x148] sm:$0xff]
    %v1830 = vld [vmem:[#allocation10 + $0x150] sm:$0xff]
    %v1831 = vld [vmem:[#allocation10 + $0x158] sm:$0xff]
    %v1832 = vld [vmem:[#allocation10 + $0x160] sm:$0xff]
    %v1833 = vld [vmem:[#allocation10 + $0x168] sm:$0xff]
    %v1834 = vld [vmem:[#allocation10 + $0x170] sm:$0xff]
    %v1835 = vld [vmem:[#allocation10 + $0x178] sm:$0xff]
    %v1836 = vld [vmem:[#allocation10 + $0x180] sm:$0xff]
    %v1837 = vld [vmem:[#allocation10 + $0x188] sm:$0xff]
    %v1838 = vld [vmem:[#allocation10 + $0x190] sm:$0xff]
    %v1839 = vld [vmem:[#allocation10 + $0x198] sm:$0xff]
    %v1840 = vld [vmem:[#allocation10 + $0x1a0] sm:$0xff]
    %v1841 = vld [vmem:[#allocation10 + $0x1a8] sm:$0xff]
    %v1842 = vld [vmem:[#allocation10 + $0x1b0] sm:$0xff]
    %v1843 = vld [vmem:[#allocation10 + $0x1b8] sm:$0xff]
    %v1844 = vld [vmem:[#allocation10 + $0x1c0] sm:$0xff]
    %v1845 = vld [vmem:[#allocation10 + $0x1c8] sm:$0xff]
    %v1846 = vld [vmem:[#allocation10 + $0x1d0] sm:$0xff]
    %v1847 = vld [vmem:[#allocation10 + $0x1d8] sm:$0xff]
    %v1848 = vld [vmem:[#allocation10 + $0x1e0] sm:$0xff]
    %v1849 = vld [vmem:[#allocation10 + $0x1e8] sm:$0xff]
    %v1850 = vld [vmem:[#allocation10 + $0x1f0] sm:$0xff]
    %v1851 = vld [vmem:[#allocation10 + $0x1f8] sm:$0xff]
    %v1852 = vld [vmem:[%s8] sm:$0xff]
    %v1854 = vlaneseq
    %v1855 = vshrl.u32 %v1854, 7
    %v1856 = vsub.s32 0, %v1855
    %v1857 = vrot.slane %v1852, %v1856
    %v1858 = vlaneseq
    %v1859 = vshrl.u32 %v1858, 7
    %v1860 = vsub.s32 1, %v1859
    %v1861 = vrot.slane %v1852, %v1860
    %v1862 = vlaneseq
    %v1863 = vshrl.u32 %v1862, 7
    %v1864 = vsub.s32 2, %v1863
    %v1865 = vrot.slane %v1852, %v1864
    %v1866 = vlaneseq
    %v1867 = vshrl.u32 %v1866, 7
    %v1868 = vsub.s32 3, %v1867
    %v1869 = vrot.slane %v1852, %v1868
    %v1870 = vlaneseq
    %v1871 = vshrl.u32 %v1870, 7
    %v1872 = vsub.s32 4, %v1871
    %v1873 = vrot.slane %v1852, %v1872
    %v1874 = vlaneseq
    %v1875 = vshrl.u32 %v1874, 7
    %v1876 = vsub.s32 5, %v1875
    %v1877 = vrot.slane %v1852, %v1876
    %v1878 = vlaneseq
    %v1879 = vshrl.u32 %v1878, 7
    %v1880 = vsub.s32 6, %v1879
    %v1881 = vrot.slane %v1852, %v1880
    %v1882 = vlaneseq
    %v1883 = vshrl.u32 %v1882, 7
    %v1884 = vsub.s32 7, %v1883
    %v1885 = vrot.slane %v1852, %v1884
    %v1958 = vunpack.c.l.b16 %v1788
    %v1959 = vunpack.c.h.b16 %v1788
    %v1960 = vunpack.c.l.b16 %v1789
    %v1961 = vunpack.c.h.b16 %v1789
    %v1962 = vunpack.c.l.b16 %v1790
    %v1963 = vunpack.c.h.b16 %v1790
    %v1964 = vunpack.c.l.b16 %v1791
    %v1965 = vunpack.c.h.b16 %v1791
    %v1966 = vunpack.c.l.b16 %v1792
    %v1967 = vunpack.c.h.b16 %v1792
    %v1968 = vunpack.c.l.b16 %v1793
    %v1969 = vunpack.c.h.b16 %v1793
    %v1970 = vunpack.c.l.b16 %v1794
    %v1971 = vunpack.c.h.b16 %v1794
    %v1972 = vunpack.c.l.b16 %v1795
    %v1973 = vunpack.c.h.b16 %v1795
    %v1974 = vunpack.c.l.b16 %v1796
    %v1975 = vunpack.c.h.b16 %v1796
    %v1976 = vunpack.c.l.b16 %v1797
    %v1977 = vunpack.c.h.b16 %v1797
    %v1978 = vunpack.c.l.b16 %v1798
    %v1979 = vunpack.c.h.b16 %v1798
    %v1980 = vunpack.c.l.b16 %v1799
    %v1981 = vunpack.c.h.b16 %v1799
    %v1982 = vunpack.c.l.b16 %v1800
    %v1983 = vunpack.c.h.b16 %v1800
    %v1984 = vunpack.c.l.b16 %v1801
    %v1985 = vunpack.c.h.b16 %v1801
    %v1986 = vunpack.c.l.b16 %v1802
    %v1987 = vunpack.c.h.b16 %v1802
    %v1988 = vunpack.c.l.b16 %v1803
    %v1989 = vunpack.c.h.b16 %v1803
    %v1990 = vunpack.c.l.b16 %v1804
    %v1991 = vunpack.c.h.b16 %v1804
    %v1992 = vunpack.c.l.b16 %v1805
    %v1993 = vunpack.c.h.b16 %v1805
    %v1994 = vunpack.c.l.b16 %v1806
    %v1995 = vunpack.c.h.b16 %v1806
    %v1996 = vunpack.c.l.b16 %v1807
    %v1997 = vunpack.c.h.b16 %v1807
    %v1998 = vunpack.c.l.b16 %v1808
    %v1999 = vunpack.c.h.b16 %v1808
    %v2000 = vunpack.c.l.b16 %v1809
    %v2001 = vunpack.c.h.b16 %v1809
    %v2002 = vunpack.c.l.b16 %v1810
    %v2003 = vunpack.c.h.b16 %v1810
    %v2004 = vunpack.c.l.b16 %v1811
    %v2005 = vunpack.c.h.b16 %v1811
    %v2006 = vunpack.c.l.b16 %v1812
    %v2007 = vunpack.c.h.b16 %v1812
    %v2008 = vunpack.c.l.b16 %v1813
    %v2009 = vunpack.c.h.b16 %v1813
    %v2010 = vunpack.c.l.b16 %v1814
    %v2011 = vunpack.c.h.b16 %v1814
    %v2012 = vunpack.c.l.b16 %v1815
    %v2013 = vunpack.c.h.b16 %v1815
    %v2014 = vunpack.c.l.b16 %v1816
    %v2015 = vunpack.c.h.b16 %v1816
    %v2016 = vunpack.c.l.b16 %v1817
    %v2017 = vunpack.c.h.b16 %v1817
    %v2018 = vunpack.c.l.b16 %v1818
    %v2019 = vunpack.c.h.b16 %v1818
    %v2020 = vunpack.c.l.b16 %v1819
    %v2021 = vunpack.c.h.b16 %v1819
    %v2022 = vunpack.c.l.b16 %v1820
    %v2023 = vunpack.c.h.b16 %v1820
    %v2024 = vunpack.c.l.b16 %v1821
    %v2025 = vunpack.c.h.b16 %v1821
    %v2026 = vunpack.c.l.b16 %v1822
    %v2027 = vunpack.c.h.b16 %v1822
    %v2028 = vunpack.c.l.b16 %v1823
    %v2029 = vunpack.c.h.b16 %v1823
    %v2030 = vunpack.c.l.b16 %v1824
    %v2031 = vunpack.c.h.b16 %v1824
    %v2032 = vunpack.c.l.b16 %v1825
    %v2033 = vunpack.c.h.b16 %v1825
    %v2034 = vunpack.c.l.b16 %v1826
    %v2035 = vunpack.c.h.b16 %v1826
    %v2036 = vunpack.c.l.b16 %v1827
    %v2037 = vunpack.c.h.b16 %v1827
    %v2038 = vunpack.c.l.b16 %v1828
    %v2039 = vunpack.c.h.b16 %v1828
    %v2040 = vunpack.c.l.b16 %v1829
    %v2041 = vunpack.c.h.b16 %v1829
    %v2042 = vunpack.c.l.b16 %v1830
    %v2043 = vunpack.c.h.b16 %v1830
    %v2044 = vunpack.c.l.b16 %v1831
    %v2045 = vunpack.c.h.b16 %v1831
    %v2046 = vunpack.c.l.b16 %v1832
    %v2047 = vunpack.c.h.b16 %v1832
    %v2048 = vunpack.c.l.b16 %v1833
    %v2049 = vunpack.c.h.b16 %v1833
    %v2050 = vunpack.c.l.b16 %v1834
    %v2051 = vunpack.c.h.b16 %v1834
    %v2052 = vunpack.c.l.b16 %v1835
    %v2053 = vunpack.c.h.b16 %v1835
    %v2054 = vunpack.c.l.b16 %v1836
    %v2055 = vunpack.c.h.b16 %v1836
    %v2056 = vunpack.c.l.b16 %v1837
    %v2057 = vunpack.c.h.b16 %v1837
    %v2058 = vunpack.c.l.b16 %v1838
    %v2059 = vunpack.c.h.b16 %v1838
    %v2060 = vunpack.c.l.b16 %v1839
    %v2061 = vunpack.c.h.b16 %v1839
    %v2062 = vunpack.c.l.b16 %v1840
    %v2063 = vunpack.c.h.b16 %v1840
    %v2064 = vunpack.c.l.b16 %v1841
    %v2065 = vunpack.c.h.b16 %v1841
    %v2066 = vunpack.c.l.b16 %v1842
    %v2067 = vunpack.c.h.b16 %v1842
    %v2068 = vunpack.c.l.b16 %v1843
    %v2069 = vunpack.c.h.b16 %v1843
    %v2070 = vunpack.c.l.b16 %v1844
    %v2071 = vunpack.c.h.b16 %v1844
    %v2072 = vunpack.c.l.b16 %v1845
    %v2073 = vunpack.c.h.b16 %v1845
    %v2074 = vunpack.c.l.b16 %v1846
    %v2075 = vunpack.c.h.b16 %v1846
    %v2076 = vunpack.c.l.b16 %v1847
    %v2077 = vunpack.c.h.b16 %v1847
    %v2078 = vunpack.c.l.b16 %v1848
    %v2079 = vunpack.c.h.b16 %v1848
    %v2080 = vunpack.c.l.b16 %v1849
    %v2081 = vunpack.c.h.b16 %v1849
    %v2082 = vunpack.c.l.b16 %v1850
    %v2083 = vunpack.c.h.b16 %v1850
    %v2084 = vunpack.c.l.b16 %v1851
    %v2085 = vunpack.c.h.b16 %v1851
    %v2086 = vpack.c.b16 %v1966, %v1958
    %v2087 = vpack.c.b16 %v1967, %v1959
    %v2088 = vpack.c.b16 %v1968, %v1960
    %v2089 = vpack.c.b16 %v1969, %v1961
    %v2090 = vpack.c.b16 %v1970, %v1962
    %v2091 = vpack.c.b16 %v1971, %v1963
    %v2092 = vpack.c.b16 %v1972, %v1964
    %v2093 = vpack.c.b16 %v1973, %v1965
    %v2094 = vpack.c.b16 %v1982, %v1974
    %v2095 = vpack.c.b16 %v1983, %v1975
    %v2096 = vpack.c.b16 %v1984, %v1976
    %v2097 = vpack.c.b16 %v1985, %v1977
    %v2098 = vpack.c.b16 %v1986, %v1978
    %v2099 = vpack.c.b16 %v1987, %v1979
    %v2100 = vpack.c.b16 %v1988, %v1980
    %v2101 = vpack.c.b16 %v1989, %v1981
    %v2102 = vpack.c.b16 %v1998, %v1990
    %v2103 = vpack.c.b16 %v1999, %v1991
    %v2104 = vpack.c.b16 %v2000, %v1992
    %v2105 = vpack.c.b16 %v2001, %v1993
    %v2106 = vpack.c.b16 %v2002, %v1994
    %v2107 = vpack.c.b16 %v2003, %v1995
    %v2108 = vpack.c.b16 %v2004, %v1996
    %v2109 = vpack.c.b16 %v2005, %v1997
    %v2110 = vpack.c.b16 %v2014, %v2006
    %v2111 = vpack.c.b16 %v2015, %v2007
    %v2112 = vpack.c.b16 %v2016, %v2008
    %v2113 = vpack.c.b16 %v2017, %v2009
    %v2114 = vpack.c.b16 %v2018, %v2010
    %v2115 = vpack.c.b16 %v2019, %v2011
    %v2116 = vpack.c.b16 %v2020, %v2012
    %v2117 = vpack.c.b16 %v2021, %v2013
    %v2118 = vpack.c.b16 %v2030, %v2022
    %v2119 = vpack.c.b16 %v2031, %v2023
    %v2120 = vpack.c.b16 %v2032, %v2024
    %v2121 = vpack.c.b16 %v2033, %v2025
    %v2122 = vpack.c.b16 %v2034, %v2026
    %v2123 = vpack.c.b16 %v2035, %v2027
    %v2124 = vpack.c.b16 %v2036, %v2028
    %v2125 = vpack.c.b16 %v2037, %v2029
    %v2126 = vpack.c.b16 %v2046, %v2038
    %v2127 = vpack.c.b16 %v2047, %v2039
    %v2128 = vpack.c.b16 %v2048, %v2040
    %v2129 = vpack.c.b16 %v2049, %v2041
    %v2130 = vpack.c.b16 %v2050, %v2042
    %v2131 = vpack.c.b16 %v2051, %v2043
    %v2132 = vpack.c.b16 %v2052, %v2044
    %v2133 = vpack.c.b16 %v2053, %v2045
    %v2134 = vpack.c.b16 %v2062, %v2054
    %v2135 = vpack.c.b16 %v2063, %v2055
    %v2136 = vpack.c.b16 %v2064, %v2056
    %v2137 = vpack.c.b16 %v2065, %v2057
    %v2138 = vpack.c.b16 %v2066, %v2058
    %v2139 = vpack.c.b16 %v2067, %v2059
    %v2140 = vpack.c.b16 %v2068, %v2060
    %v2141 = vpack.c.b16 %v2069, %v2061
    %v2142 = vpack.c.b16 %v2078, %v2070
    %v2143 = vpack.c.b16 %v2079, %v2071
    %v2144 = vpack.c.b16 %v2080, %v2072
    %v2145 = vpack.c.b16 %v2081, %v2073
    %v2146 = vpack.c.b16 %v2082, %v2074
    %v2147 = vpack.c.b16 %v2083, %v2075
    %v2148 = vpack.c.b16 %v2084, %v2076
    %v2149 = vpack.c.b16 %v2085, %v2077
    %2214 = vmatprep.subr.bf16.mxu0 %v2087
    %2215 = vmatpush1.bf16.msra.mxu0 %v2086
    %2216 = vmatprep.subr.bf16.mxu0 %v2095
    %2217 = vmatpush1.bf16.msra.mxu0 %v2094
    %2218 = vmatprep.subr.bf16.mxu0 %v2103
    %2219 = vmatpush1.bf16.msra.mxu0 %v2102
    %2220 = vmatprep.subr.bf16.mxu0 %v2111
    %2221 = vmatpush1.bf16.msra.mxu0 %v2110
    %2222 = vmatprep.subr.bf16.mxu0 %v2119
    %2223 = vmatpush1.bf16.msra.mxu0 %v2118
    %2224 = vmatprep.subr.bf16.mxu0 %v2127
    %2225 = vmatpush1.bf16.msra.mxu0 %v2126
    %2226 = vmatprep.subr.bf16.mxu0 %v2135
    %2227 = vmatpush1.bf16.msra.mxu0 %v2134
    %2228 = vmatprep.subr.bf16.mxu0 %v2143
    %2229 = vmatpush1.bf16.msra.mxu0 %v2142
    %2230 = vmatprep.subr.bf16.mxu0 0
    %2231 = vmatpush1.bf16.msra.mxu0 0
    %2232 = vmatprep.subr.bf16.mxu0 0
    %2233 = vmatpush1.bf16.msra.mxu0 0
    %2234 = vmatprep.subr.bf16.mxu0 0
    %2235 = vmatpush1.bf16.msra.mxu0 0
    %2236 = vmatprep.subr.bf16.mxu0 0
    %2237 = vmatpush1.bf16.msra.mxu0 0
    %2238 = vmatprep.subr.bf16.mxu0 0
    %2239 = vmatpush1.bf16.msra.mxu0 0
    %2240 = vmatprep.subr.bf16.mxu0 0
    %2241 = vmatpush1.bf16.msra.mxu0 0
    %2242 = vmatprep.subr.bf16.mxu0 0
    %2243 = vmatpush1.bf16.msra.mxu0 0
    %2244 = vmatprep.subr.bf16.mxu0 0
    %2245 = vmatpush1.bf16.msra.mxu0 0
    %2246 = vmatprep.mubr.bf16.mxu0 0
    %2247 = vmatmul.mubr.bf16.gmra.mrb[0].mxu0 %v1780
    %v2248 = vpop.f32.mrb[0].mxu0
    %v2249 = vadd.f32 %v1857, %v2248
    %v2250 = vpop.f32.mrb[0].mxu0
    %v2251 = vadd.f32 %v1861, %v2250
    %v2252 = vpop.f32.mrb[0].mxu0
    %v2253 = vadd.f32 %v1857, %v2252
    %v2254 = vpop.f32.mrb[0].mxu0
    %v2255 = vadd.f32 %v1861, %v2254
    %2256 = vmatprep.mubr.bf16.mxu0 0
    %2257 = vmatmul.mubr.bf16.gmra.mrb[0].mxu0 %v1781
    %v2258 = vpop.f32.mrb[0].mxu0
    %v2259 = vadd.f32 %v1857, %v2258
    %v2260 = vpop.f32.mrb[0].mxu0
    %v2261 = vadd.f32 %v1861, %v2260
    %v2262 = vpop.f32.mrb[0].mxu0
    %v2263 = vadd.f32 %v1857, %v2262
    %v2264 = vpop.f32.mrb[0].mxu0
    %v2265 = vadd.f32 %v1861, %v2264
    %2266 = vmatprep.mubr.bf16.mxu0 0
    %2267 = vmatmul.mubr.bf16.gmra.mrb[0].mxu0 %v1782
    %v2268 = vpop.f32.mrb[0].mxu0
    %v2269 = vadd.f32 %v1857, %v2268
    %v2270 = vpop.f32.mrb[0].mxu0
    %v2271 = vadd.f32 %v1861, %v2270
    %v2272 = vpop.f32.mrb[0].mxu0
    %v2273 = vadd.f32 %v1857, %v2272
    %v2274 = vpop.f32.mrb[0].mxu0
    %v2275 = vadd.f32 %v1861, %v2274
    %2276 = vmatprep.mubr.bf16.mxu0 0
    %2277 = vmatmul.mubr.bf16.gmra.mrb[0].mxu0 %v1783
    %v2278 = vpop.f32.mrb[0].mxu0
    %v2279 = vadd.f32 %v1857, %v2278
    %v2280 = vpop.f32.mrb[0].mxu0
    %v2281 = vadd.f32 %v1861, %v2280
    %v2282 = vpop.f32.mrb[0].mxu0
    %v2283 = vadd.f32 %v1857, %v2282
    %v2284 = vpop.f32.mrb[0].mxu0
    %v2285 = vadd.f32 %v1861, %v2284
    %2286 = vmatprep.mubr.bf16.mxu0 0
    %2287 = vmatmul.mubr.bf16.gmra.mrb[0].mxu0 %v1784
    %v2288 = vpop.f32.mrb[0].mxu0
    %v2289 = vadd.f32 %v1857, %v2288
    %v2290 = vpop.f32.mrb[0].mxu0
    %v2291 = vadd.f32 %v1861, %v2290
    %v2292 = vpop.f32.mrb[0].mxu0
    %v2293 = vadd.f32 %v1857, %v2292
    %v2294 = vpop.f32.mrb[0].mxu0
    %v2295 = vadd.f32 %v1861, %v2294
    %2296 = vmatprep.mubr.bf16.mxu0 0
    %2297 = vmatmul.mubr.bf16.gmra.mrb[0].mxu0 %v1785
    %v2298 = vpop.f32.mrb[0].mxu0
    %v2299 = vadd.f32 %v1857, %v2298
    %v2300 = vpop.f32.mrb[0].mxu0
    %v2301 = vadd.f32 %v1861, %v2300
    %v2302 = vpop.f32.mrb[0].mxu0
    %v2303 = vadd.f32 %v1857, %v2302
    %v2304 = vpop.f32.mrb[0].mxu0
    %v2305 = vadd.f32 %v1861, %v2304
    %2306 = vmatprep.mubr.bf16.mxu0 0
    %2307 = vmatmul.mubr.bf16.gmra.mrb[0].mxu0 %v1786
    %v2308 = vpop.f32.mrb[0].mxu0
    %v2309 = vadd.f32 %v1857, %v2308
    %v2310 = vpop.f32.mrb[0].mxu0
    %v2311 = vadd.f32 %v1861, %v2310
    %v2312 = vpop.f32.mrb[0].mxu0
    %v2313 = vadd.f32 %v1857, %v2312
    %v2314 = vpop.f32.mrb[0].mxu0
    %v2315 = vadd.f32 %v1861, %v2314
    %2316 = vmatprep.mubr.bf16.mxu0 0
    %2317 = vmatmul.mubr.bf16.gmra.mrb[0].mxu0 %v1787
    %v2318 = vpop.f32.mrb[0].mxu0
    %v2319 = vadd.f32 %v1857, %v2318
    %v2320 = vpop.f32.mrb[0].mxu0
    %v2321 = vadd.f32 %v1861, %v2320
    %v2322 = vpop.f32.mrb[0].mxu0
    %v2323 = vadd.f32 %v1857, %v2322
    %v2324 = vpop.f32.mrb[0].mxu0
    %v2325 = vadd.f32 %v1861, %v2324
    %2326 = vdwg.mxu0
    %2327 = vmatprep.subr.bf16.mxu0 %v2089
    %2328 = vmatpush1.bf16.msra.mxu0 %v2088
    %2329 = vmatprep.subr.bf16.mxu0 %v2097
    %2330 = vmatpush1.bf16.msra.mxu0 %v2096
    %2331 = vmatprep.subr.bf16.mxu0 %v2105
    %2332 = vmatpush1.bf16.msra.mxu0 %v2104
    %2333 = vmatprep.subr.bf16.mxu0 %v2113
    %2334 = vmatpush1.bf16.msra.mxu0 %v2112
    %2335 = vmatprep.subr.bf16.mxu0 %v2121
    %2336 = vmatpush1.bf16.msra.mxu0 %v2120
    %2337 = vmatprep.subr.bf16.mxu0 %v2129
    %2338 = vmatpush1.bf16.msra.mxu0 %v2128
    %2339 = vmatprep.subr.bf16.mxu0 %v2137
    %2340 = vmatpush1.bf16.msra.mxu0 %v2136
    %2341 = vmatprep.subr.bf16.mxu0 %v2145
    %2342 = vmatpush1.bf16.msra.mxu0 %v2144
    %2343 = vmatprep.subr.bf16.mxu0 0
    %2344 = vmatpush1.bf16.msra.mxu0 0
    %2345 = vmatprep.subr.bf16.mxu0 0
    %2346 = vmatpush1.bf16.msra.mxu0 0
    %2347 = vmatprep.subr.bf16.mxu0 0
    %2348 = vmatpush1.bf16.msra.mxu0 0
    %2349 = vmatprep.subr.bf16.mxu0 0
    %2350 = vmatpush1.bf16.msra.mxu0 0
    %2351 = vmatprep.subr.bf16.mxu0 0
    %2352 = vmatpush1.bf16.msra.mxu0 0
    %2353 = vmatprep.subr.bf16.mxu0 0
    %2354 = vmatpush1.bf16.msra.mxu0 0
    %2355 = vmatprep.subr.bf16.mxu0 0
    %2356 = vmatpush1.bf16.msra.mxu0 0
    %2357 = vmatprep.subr.bf16.mxu0 0
    %2358 = vmatpush1.bf16.msra.mxu0 0
    %2359 = vmatprep.mubr.bf16.mxu0 0
    %2360 = vmatmul.mubr.bf16.gmra.mrb[0].mxu0 %v1780
    %v2361 = vpop.f32.mrb[0].mxu0
    %v2362 = vadd.f32 %v1865, %v2361
    %v2363 = vpop.f32.mrb[0].mxu0
    %v2364 = vadd.f32 %v1869, %v2363
    %v2365 = vpop.f32.mrb[0].mxu0
    %v2366 = vadd.f32 %v1865, %v2365
    %v2367 = vpop.f32.mrb[0].mxu0
    %v2368 = vadd.f32 %v1869, %v2367
    %2369 = vmatprep.mubr.bf16.mxu0 0
    %2370 = vmatmul.mubr.bf16.gmra.mrb[0].mxu0 %v1781
    %v2371 = vpop.f32.mrb[0].mxu0
    %v2372 = vadd.f32 %v1865, %v2371
    %v2373 = vpop.f32.mrb[0].mxu0
    %v2374 = vadd.f32 %v1869, %v2373
    %v2375 = vpop.f32.mrb[0].mxu0
    %v2376 = vadd.f32 %v1865, %v2375
    %v2377 = vpop.f32.mrb[0].mxu0
    %v2378 = vadd.f32 %v1869, %v2377
    %2379 = vmatprep.mubr.bf16.mxu0 0
    %2380 = vmatmul.mubr.bf16.gmra.mrb[0].mxu0 %v1782
    %v2381 = vpop.f32.mrb[0].mxu0
    %v2382 = vadd.f32 %v1865, %v2381
    %v2383 = vpop.f32.mrb[0].mxu0
    %v2384 = vadd.f32 %v1869, %v2383
    %v2385 = vpop.f32.mrb[0].mxu0
    %v2386 = vadd.f32 %v1865, %v2385
    %v2387 = vpop.f32.mrb[0].mxu0
    %v2388 = vadd.f32 %v1869, %v2387
    %2389 = vmatprep.mubr.bf16.mxu0 0
    %2390 = vmatmul.mubr.bf16.gmra.mrb[0].mxu0 %v1783
    %v2391 = vpop.f32.mrb[0].mxu0
    %v2392 = vadd.f32 %v1865, %v2391
    %v2393 = vpop.f32.mrb[0].mxu0
    %v2394 = vadd.f32 %v1869, %v2393
    %v2395 = vpop.f32.mrb[0].mxu0
    %v2396 = vadd.f32 %v1865, %v2395
    %v2397 = vpop.f32.mrb[0].mxu0
    %v2398 = vadd.f32 %v1869, %v2397
    %2399 = vmatprep.mubr.bf16.mxu0 0
    %2400 = vmatmul.mubr.bf16.gmra.mrb[0].mxu0 %v1784
    %v2401 = vpop.f32.mrb[0].mxu0
    %v2402 = vadd.f32 %v1865, %v2401
    %v2403 = vpop.f32.mrb[0].mxu0
    %v2404 = vadd.f32 %v1869, %v2403
    %v2405 = vpop.f32.mrb[0].mxu0
    %v2406 = vadd.f32 %v1865, %v2405
    %v2407 = vpop.f32.mrb[0].mxu0
    %v2408 = vadd.f32 %v1869, %v2407
    %2409 = vmatprep.mubr.bf16.mxu0 0
    %2410 = vmatmul.mubr.bf16.gmra.mrb[0].mxu0 %v1785
    %v2411 = vpop.f32.mrb[0].mxu0
    %v2412 = vadd.f32 %v1865, %v2411
    %v2413 = vpop.f32.mrb[0].mxu0
    %v2414 = vadd.f32 %v1869, %v2413
    %v2415 = vpop.f32.mrb[0].mxu0
    %v2416 = vadd.f32 %v1865, %v2415
    %v2417 = vpop.f32.mrb[0].mxu0
    %v2418 = vadd.f32 %v1869, %v2417
    %2419 = vmatprep.mubr.bf16.mxu0 0
    %2420 = vmatmul.mubr.bf16.gmra.mrb[0].mxu0 %v1786
    %v2421 = vpop.f32.mrb[0].mxu0
    %v2422 = vadd.f32 %v1865, %v2421
    %v2423 = vpop.f32.mrb[0].mxu0
    %v2424 = vadd.f32 %v1869, %v2423
    %v2425 = vpop.f32.mrb[0].mxu0
    %v2426 = vadd.f32 %v1865, %v2425
    %v2427 = vpop.f32.mrb[0].mxu0
    %v2428 = vadd.f32 %v1869, %v2427
    %2429 = vmatprep.mubr.bf16.mxu0 0
    %2430 = vmatmul.mubr.bf16.gmra.mrb[0].mxu0 %v1787
    %v2431 = vpop.f32.mrb[0].mxu0
    %v2432 = vadd.f32 %v1865, %v2431
    %v2433 = vpop.f32.mrb[0].mxu0
    %v2434 = vadd.f32 %v1869, %v2433
    %v2435 = vpop.f32.mrb[0].mxu0
    %v2436 = vadd.f32 %v1865, %v2435
    %v2437 = vpop.f32.mrb[0].mxu0
    %v2438 = vadd.f32 %v1869, %v2437
    %2439 = vdwg.mxu0
    %2440 = vmatprep.subr.bf16.mxu0 %v2091
    %2441 = vmatpush1.bf16.msra.mxu0 %v2090
    %2442 = vmatprep.subr.bf16.mxu0 %v2099
    %2443 = vmatpush1.bf16.msra.mxu0 %v2098
    %2444 = vmatprep.subr.bf16.mxu0 %v2107
    %2445 = vmatpush1.bf16.msra.mxu0 %v2106
    %2446 = vmatprep.subr.bf16.mxu0 %v2115
    %2447 = vmatpush1.bf16.msra.mxu0 %v2114
    %2448 = vmatprep.subr.bf16.mxu0 %v2123
    %2449 = vmatpush1.bf16.msra.mxu0 %v2122
    %2450 = vmatprep.subr.bf16.mxu0 %v2131
    %2451 = vmatpush1.bf16.msra.mxu0 %v2130
    %2452 = vmatprep.subr.bf16.mxu0 %v2139
    %2453 = vmatpush1.bf16.msra.mxu0 %v2138
    %2454 = vmatprep.subr.bf16.mxu0 %v2147
    %2455 = vmatpush1.bf16.msra.mxu0 %v2146
    %2456 = vmatprep.subr.bf16.mxu0 0
    %2457 = vmatpush1.bf16.msra.mxu0 0
    %2458 = vmatprep.subr.bf16.mxu0 0
    %2459 = vmatpush1.bf16.msra.mxu0 0
    %2460 = vmatprep.subr.bf16.mxu0 0
    %2461 = vmatpush1.bf16.msra.mxu0 0
    %2462 = vmatprep.subr.bf16.mxu0 0
    %2463 = vmatpush1.bf16.msra.mxu0 0
    %2464 = vmatprep.subr.bf16.mxu0 0
    %2465 = vmatpush1.bf16.msra.mxu0 0
    %2466 = vmatprep.subr.bf16.mxu0 0
    %2467 = vmatpush1.bf16.msra.mxu0 0
    %2468 = vmatprep.subr.bf16.mxu0 0
    %2469 = vmatpush1.bf16.msra.mxu0 0
    %2470 = vmatprep.subr.bf16.mxu0 0
    %2471 = vmatpush1.bf16.msra.mxu0 0
    %2472 = vmatprep.mubr.bf16.mxu0 0
    %2473 = vmatmul.mubr.bf16.gmra.mrb[0].mxu0 %v1780
    %v2474 = vpop.f32.mrb[0].mxu0
    %v2475 = vadd.f32 %v1873, %v2474
    %v2476 = vpop.f32.mrb[0].mxu0
    %v2477 = vadd.f32 %v1877, %v2476
    %v2478 = vpop.f32.mrb[0].mxu0
    %v2479 = vadd.f32 %v1873, %v2478
    %v2480 = vpop.f32.mrb[0].mxu0
    %v2481 = vadd.f32 %v1877, %v2480
    %2482 = vmatprep.mubr.bf16.mxu0 0
    %2483 = vmatmul.mubr.bf16.gmra.mrb[0].mxu0 %v1781
    %v2484 = vpop.f32.mrb[0].mxu0
    %v2485 = vadd.f32 %v1873, %v2484
    %v2486 = vpop.f32.mrb[0].mxu0
    %v2487 = vadd.f32 %v1877, %v2486
    %v2488 = vpop.f32.mrb[0].mxu0
    %v2489 = vadd.f32 %v1873, %v2488
    %v2490 = vpop.f32.mrb[0].mxu0
    %v2491 = vadd.f32 %v1877, %v2490
    %2492 = vmatprep.mubr.bf16.mxu0 0
    %2493 = vmatmul.mubr.bf16.gmra.mrb[0].mxu0 %v1782
    %v2494 = vpop.f32.mrb[0].mxu0
    %v2495 = vadd.f32 %v1873, %v2494
    %v2496 = vpop.f32.mrb[0].mxu0
    %v2497 = vadd.f32 %v1877, %v2496
    %v2498 = vpop.f32.mrb[0].mxu0
    %v2499 = vadd.f32 %v1873, %v2498
    %v2500 = vpop.f32.mrb[0].mxu0
    %v2501 = vadd.f32 %v1877, %v2500
    %2502 = vmatprep.mubr.bf16.mxu0 0
    %2503 = vmatmul.mubr.bf16.gmra.mrb[0].mxu0 %v1783
    %v2504 = vpop.f32.mrb[0].mxu0
    %v2505 = vadd.f32 %v1873, %v2504
    %v2506 = vpop.f32.mrb[0].mxu0
    %v2507 = vadd.f32 %v1877, %v2506
    %v2508 = vpop.f32.mrb[0].mxu0
    %v2509 = vadd.f32 %v1873, %v2508
    %v2510 = vpop.f32.mrb[0].mxu0
    %v2511 = vadd.f32 %v1877, %v2510
    %2512 = vmatprep.mubr.bf16.mxu0 0
    %2513 = vmatmul.mubr.bf16.gmra.mrb[0].mxu0 %v1784
    %v2514 = vpop.f32.mrb[0].mxu0
    %v2515 = vadd.f32 %v1873, %v2514
    %v2516 = vpop.f32.mrb[0].mxu0
    %v2517 = vadd.f32 %v1877, %v2516
    %v2518 = vpop.f32.mrb[0].mxu0
    %v2519 = vadd.f32 %v1873, %v2518
    %v2520 = vpop.f32.mrb[0].mxu0
    %v2521 = vadd.f32 %v1877, %v2520
    %2522 = vmatprep.mubr.bf16.mxu0 0
    %2523 = vmatmul.mubr.bf16.gmra.mrb[0].mxu0 %v1785
    %v2524 = vpop.f32.mrb[0].mxu0
    %v2525 = vadd.f32 %v1873, %v2524
    %v2526 = vpop.f32.mrb[0].mxu0
    %v2527 = vadd.f32 %v1877, %v2526
    %v2528 = vpop.f32.mrb[0].mxu0
    %v2529 = vadd.f32 %v1873, %v2528
    %v2530 = vpop.f32.mrb[0].mxu0
    %v2531 = vadd.f32 %v1877, %v2530
    %2532 = vmatprep.mubr.bf16.mxu0 0
    %2533 = vmatmul.mubr.bf16.gmra.mrb[0].mxu0 %v1786
    %v2534 = vpop.f32.mrb[0].mxu0
    %v2535 = vadd.f32 %v1873, %v2534
    %v2536 = vpop.f32.mrb[0].mxu0
    %v2537 = vadd.f32 %v1877, %v2536
    %v2538 = vpop.f32.mrb[0].mxu0
    %v2539 = vadd.f32 %v1873, %v2538
    %v2540 = vpop.f32.mrb[0].mxu0
    %v2541 = vadd.f32 %v1877, %v2540
    %2542 = vmatprep.mubr.bf16.mxu0 0
    %2543 = vmatmul.mubr.bf16.gmra.mrb[0].mxu0 %v1787
    %v2544 = vpop.f32.mrb[0].mxu0
    %v2545 = vadd.f32 %v1873, %v2544
    %v2546 = vpop.f32.mrb[0].mxu0
    %v2547 = vadd.f32 %v1877, %v2546
    %v2548 = vpop.f32.mrb[0].mxu0
    %v2549 = vadd.f32 %v1873, %v2548
    %v2550 = vpop.f32.mrb[0].mxu0
    %v2551 = vadd.f32 %v1877, %v2550
    %2552 = vdwg.mxu0
    %2553 = vmatprep.subr.bf16.mxu0 %v2093
    %2554 = vmatpush1.bf16.msra.mxu0 %v2092
    %2555 = vmatprep.subr.bf16.mxu0 %v2101
    %2556 = vmatpush1.bf16.msra.mxu0 %v2100
    %2557 = vmatprep.subr.bf16.mxu0 %v2109
    %2558 = vmatpush1.bf16.msra.mxu0 %v2108
    %2559 = vmatprep.subr.bf16.mxu0 %v2117
    %2560 = vmatpush1.bf16.msra.mxu0 %v2116
    %2561 = vmatprep.subr.bf16.mxu0 %v2125
    %2562 = vmatpush1.bf16.msra.mxu0 %v2124
    %2563 = vmatprep.subr.bf16.mxu0 %v2133
    %2564 = vmatpush1.bf16.msra.mxu0 %v2132
    %2565 = vmatprep.subr.bf16.mxu0 %v2141
    %2566 = vmatpush1.bf16.msra.mxu0 %v2140
    %2567 = vmatprep.subr.bf16.mxu0 %v2149
    %2568 = vmatpush1.bf16.msra.mxu0 %v2148
    %2569 = vmatprep.subr.bf16.mxu0 0
    %2570 = vmatpush1.bf16.msra.mxu0 0
    %2571 = vmatprep.subr.bf16.mxu0 0
    %2572 = vmatpush1.bf16.msra.mxu0 0
    %2573 = vmatprep.subr.bf16.mxu0 0
    %2574 = vmatpush1.bf16.msra.mxu0 0
    %2575 = vmatprep.subr.bf16.mxu0 0
    %2576 = vmatpush1.bf16.msra.mxu0 0
    %2577 = vmatprep.subr.bf16.mxu0 0
    %2578 = vmatpush1.bf16.msra.mxu0 0
    %2579 = vmatprep.subr.bf16.mxu0 0
    %2580 = vmatpush1.bf16.msra.mxu0 0
    %2581 = vmatprep.subr.bf16.mxu0 0
    %2582 = vmatpush1.bf16.msra.mxu0 0
    %2583 = vmatprep.subr.bf16.mxu0 0
    %2584 = vmatpush1.bf16.msra.mxu0 0
    %2585 = vmatprep.mubr.bf16.mxu0 0
    %2586 = vmatmul.mubr.bf16.gmra.mrb[0].mxu0 %v1780
    %v2587 = vpop.f32.mrb[0].mxu0
    %v2588 = vadd.f32 %v1881, %v2587
    %v2589 = vpop.f32.mrb[0].mxu0
    %v2590 = vadd.f32 %v1885, %v2589
    %v2591 = vpop.f32.mrb[0].mxu0
    %v2592 = vadd.f32 %v1881, %v2591
    %v2593 = vpop.f32.mrb[0].mxu0
    %v2594 = vadd.f32 %v1885, %v2593
    %2595 = vmatprep.mubr.bf16.mxu0 0
    %2596 = vmatmul.mubr.bf16.gmra.mrb[0].mxu0 %v1781
    %v2597 = vpop.f32.mrb[0].mxu0
    %v2598 = vadd.f32 %v1881, %v2597
    %v2599 = vpop.f32.mrb[0].mxu0
    %v2600 = vadd.f32 %v1885, %v2599
    %v2601 = vpop.f32.mrb[0].mxu0
    %v2602 = vadd.f32 %v1881, %v2601
    %v2603 = vpop.f32.mrb[0].mxu0
    %v2604 = vadd.f32 %v1885, %v2603
    %2605 = vmatprep.mubr.bf16.mxu0 0
    %2606 = vmatmul.mubr.bf16.gmra.mrb[0].mxu0 %v1782
    %v2607 = vpop.f32.mrb[0].mxu0
    %v2608 = vadd.f32 %v1881, %v2607
    %v2609 = vpop.f32.mrb[0].mxu0
    %v2610 = vadd.f32 %v1885, %v2609
    %v2611 = vpop.f32.mrb[0].mxu0
    %v2612 = vadd.f32 %v1881, %v2611
    %v2613 = vpop.f32.mrb[0].mxu0
    %v2614 = vadd.f32 %v1885, %v2613
    %2615 = vmatprep.mubr.bf16.mxu0 0
    %2616 = vmatmul.mubr.bf16.gmra.mrb[0].mxu0 %v1783
    %v2617 = vpop.f32.mrb[0].mxu0
    %v2618 = vadd.f32 %v1881, %v2617
    %v2619 = vpop.f32.mrb[0].mxu0
    %v2620 = vadd.f32 %v1885, %v2619
    %v2621 = vpop.f32.mrb[0].mxu0
    %v2622 = vadd.f32 %v1881, %v2621
    %v2623 = vpop.f32.mrb[0].mxu0
    %v2624 = vadd.f32 %v1885, %v2623
    %2625 = vmatprep.mubr.bf16.mxu0 0
    %2626 = vmatmul.mubr.bf16.gmra.mrb[0].mxu0 %v1784
    %v2627 = vpop.f32.mrb[0].mxu0
    %v2628 = vadd.f32 %v1881, %v2627
    %v2629 = vpop.f32.mrb[0].mxu0
    %v2630 = vadd.f32 %v1885, %v2629
    %v2631 = vpop.f32.mrb[0].mxu0
    %v2632 = vadd.f32 %v1881, %v2631
    %v2633 = vpop.f32.mrb[0].mxu0
    %v2634 = vadd.f32 %v1885, %v2633
    %2635 = vmatprep.mubr.bf16.mxu0 0
    %2636 = vmatmul.mubr.bf16.gmra.mrb[0].mxu0 %v1785
    %v2637 = vpop.f32.mrb[0].mxu0
    %v2638 = vadd.f32 %v1881, %v2637
    %v2639 = vpop.f32.mrb[0].mxu0
    %v2640 = vadd.f32 %v1885, %v2639
    %v2641 = vpop.f32.mrb[0].mxu0
    %v2642 = vadd.f32 %v1881, %v2641
    %v2643 = vpop.f32.mrb[0].mxu0
    %v2644 = vadd.f32 %v1885, %v2643
    %2645 = vmatprep.mubr.bf16.mxu0 0
    %2646 = vmatmul.mubr.bf16.gmra.mrb[0].mxu0 %v1786
    %v2647 = vpop.f32.mrb[0].mxu0
    %v2648 = vadd.f32 %v1881, %v2647
    %v2649 = vpop.f32.mrb[0].mxu0
    %v2650 = vadd.f32 %v1885, %v2649
    %v2651 = vpop.f32.mrb[0].mxu0
    %v2652 = vadd.f32 %v1881, %v2651
    %v2653 = vpop.f32.mrb[0].mxu0
    %v2654 = vadd.f32 %v1885, %v2653
    %2655 = vmatprep.mubr.bf16.mxu0 0
    %2656 = vmatmul.mubr.bf16.gmra.mrb[0].mxu0 %v1787
    %v2657 = vpop.f32.mrb[0].mxu0
    %v2658 = vadd.f32 %v1881, %v2657
    %v2659 = vpop.f32.mrb[0].mxu0
    %v2660 = vadd.f32 %v1885, %v2659
    %v2661 = vpop.f32.mrb[0].mxu0
    %v2662 = vadd.f32 %v1881, %v2661
    %v2663 = vpop.f32.mrb[0].mxu0
    %v2664 = vadd.f32 %v1885, %v2663
    %2665 = vdwg.mxu0
    %2666 = vst [vmem:[#allocation12] sm:$0xff] %v1526
    %2667 = vst [vmem:[#allocation12 + $0x8] sm:$0xff] %v1529
    %2668 = vst [vmem:[#allocation12 + $0x10] sm:$0xff] %v1534
    %2669 = vst [vmem:[#allocation12 + $0x18] sm:$0xff] %v1537
    %2670 = vst [vmem:[#allocation12 + $0x20] sm:$0xff] %v1542
    %2671 = vst [vmem:[#allocation12 + $0x28] sm:$0xff] %v1545
    %2672 = vst [vmem:[#allocation12 + $0x30] sm:$0xff] %v1550
    %2673 = vst [vmem:[#allocation12 + $0x38] sm:$0xff] %v1553
    %2674 = vst [vmem:[#allocation12 + $0x40] sm:$0xff] %v1558
    %2675 = vst [vmem:[#allocation12 + $0x48] sm:$0xff] %v1561
    %2676 = vst [vmem:[#allocation12 + $0x50] sm:$0xff] %v1566
    %2677 = vst [vmem:[#allocation12 + $0x58] sm:$0xff] %v1569
    %2678 = vst [vmem:[#allocation12 + $0x60] sm:$0xff] %v1574
    %2679 = vst [vmem:[#allocation12 + $0x68] sm:$0xff] %v1577
    %2680 = vst [vmem:[#allocation12 + $0x70] sm:$0xff] %v1582
    %2681 = vst [vmem:[#allocation12 + $0x78] sm:$0xff] %v1585
    %2682 = vst [vmem:[#allocation11] sm:$0xff] %v2249
    %2683 = vst [vmem:[#allocation11 + $0x8] sm:$0xff] %v2251
    %2684 = vst [vmem:[#allocation11 + $0x10] sm:$0xff] %v2362
    %2685 = vst [vmem:[#allocation11 + $0x18] sm:$0xff] %v2364
    %2686 = vst [vmem:[#allocation11 + $0x20] sm:$0xff] %v2475
    %2687 = vst [vmem:[#allocation11 + $0x28] sm:$0xff] %v2477
    %2688 = vst [vmem:[#allocation11 + $0x30] sm:$0xff] %v2588
    %2689 = vst [vmem:[#allocation11 + $0x38] sm:$0xff] %v2590
    %2690 = vst [vmem:[#allocation11 + $0x40] sm:$0xff] %v2253
    %2691 = vst [vmem:[#allocation11 + $0x48] sm:$0xff] %v2255
    %2692 = vst [vmem:[#allocation11 + $0x50] sm:$0xff] %v2366
    %2693 = vst [vmem:[#allocation11 + $0x58] sm:$0xff] %v2368
    %2694 = vst [vmem:[#allocation11 + $0x60] sm:$0xff] %v2479
    %2695 = vst [vmem:[#allocation11 + $0x68] sm:$0xff] %v2481
    %2696 = vst [vmem:[#allocation11 + $0x70] sm:$0xff] %v2592
    %2697 = vst [vmem:[#allocation11 + $0x78] sm:$0xff] %v2594
    %2698 = vst [vmem:[#allocation11 + $0x80] sm:$0xff] %v2259
    %2699 = vst [vmem:[#allocation11 + $0x88] sm:$0xff] %v2261
    %2700 = vst [vmem:[#allocation11 + $0x90] sm:$0xff] %v2372
    %2701 = vst [vmem:[#allocation11 + $0x98] sm:$0xff] %v2374
    %2702 = vst [vmem:[#allocation11 + $0xa0] sm:$0xff] %v2485
    %2703 = vst [vmem:[#allocation11 + $0xa8] sm:$0xff] %v2487
    %2704 = vst [vmem:[#allocation11 + $0xb0] sm:$0xff] %v2598
    %2705 = vst [vmem:[#allocation11 + $0xb8] sm:$0xff] %v2600
    %2706 = vst [vmem:[#allocation11 + $0xc0] sm:$0xff] %v2263
    %2707 = vst [vmem:[#allocation11 + $0xc8] sm:$0xff] %v2265
    %2708 = vst [vmem:[#allocation11 + $0xd0] sm:$0xff] %v2376
    %2709 = vst [vmem:[#allocation11 + $0xd8] sm:$0xff] %v2378
    %2710 = vst [vmem:[#allocation11 + $0xe0] sm:$0xff] %v2489
    %2711 = vst [vmem:[#allocation11 + $0xe8] sm:$0xff] %v2491
    %2712 = vst [vmem:[#allocation11 + $0xf0] sm:$0xff] %v2602
    %2713 = vst [vmem:[#allocation11 + $0xf8] sm:$0xff] %v2604
    %2714 = vst [vmem:[#allocation11 + $0x100] sm:$0xff] %v2269
    %2715 = vst [vmem:[#allocation11 + $0x108] sm:$0xff] %v2271
    %2716 = vst [vmem:[#allocation11 + $0x110] sm:$0xff] %v2382
    %2717 = vst [vmem:[#allocation11 + $0x118] sm:$0xff] %v2384
    %2718 = vst [vmem:[#allocation11 + $0x120] sm:$0xff] %v2495
    %2719 = vst [vmem:[#allocation11 + $0x128] sm:$0xff] %v2497
    %2720 = vst [vmem:[#allocation11 + $0x130] sm:$0xff] %v2608
    %2721 = vst [vmem:[#allocation11 + $0x138] sm:$0xff] %v2610
    %2722 = vst [vmem:[#allocation11 + $0x140] sm:$0xff] %v2273
    %2723 = vst [vmem:[#allocation11 + $0x148] sm:$0xff] %v2275
    %2724 = vst [vmem:[#allocation11 + $0x150] sm:$0xff] %v2386
    %2725 = vst [vmem:[#allocation11 + $0x158] sm:$0xff] %v2388
    %2726 = vst [vmem:[#allocation11 + $0x160] sm:$0xff] %v2499
    %2727 = vst [vmem:[#allocation11 + $0x168] sm:$0xff] %v2501
    %2728 = vst [vmem:[#allocation11 + $0x170] sm:$0xff] %v2612
    %2729 = vst [vmem:[#allocation11 + $0x178] sm:$0xff] %v2614
    %2730 = vst [vmem:[#allocation11 + $0x180] sm:$0xff] %v2279
    %2731 = vst [vmem:[#allocation11 + $0x188] sm:$0xff] %v2281
    %2732 = vst [vmem:[#allocation11 + $0x190] sm:$0xff] %v2392
    %2733 = vst [vmem:[#allocation11 + $0x198] sm:$0xff] %v2394
    %2734 = vst [vmem:[#allocation11 + $0x1a0] sm:$0xff] %v2505
    %2735 = vst [vmem:[#allocation11 + $0x1a8] sm:$0xff] %v2507
    %2736 = vst [vmem:[#allocation11 + $0x1b0] sm:$0xff] %v2618
    %2737 = vst [vmem:[#allocation11 + $0x1b8] sm:$0xff] %v2620
    %2738 = vst [vmem:[#allocation11 + $0x1c0] sm:$0xff] %v2283
    %2739 = vst [vmem:[#allocation11 + $0x1c8] sm:$0xff] %v2285
    %2740 = vst [vmem:[#allocation11 + $0x1d0] sm:$0xff] %v2396
    %2741 = vst [vmem:[#allocation11 + $0x1d8] sm:$0xff] %v2398
    %2742 = vst [vmem:[#allocation11 + $0x1e0] sm:$0xff] %v2509
    %2743 = vst [vmem:[#allocation11 + $0x1e8] sm:$0xff] %v2511
    %2744 = vst [vmem:[#allocation11 + $0x1f0] sm:$0xff] %v2622
    %2745 = vst [vmem:[#allocation11 + $0x1f8] sm:$0xff] %v2624
    %2746 = vst [vmem:[#allocation11 + $0x200] sm:$0xff] %v2289
    %2747 = vst [vmem:[#allocation11 + $0x208] sm:$0xff] %v2291
    %2748 = vst [vmem:[#allocation11 + $0x210] sm:$0xff] %v2402
    %2749 = vst [vmem:[#allocation11 + $0x218] sm:$0xff] %v2404
    %2750 = vst [vmem:[#allocation11 + $0x220] sm:$0xff] %v2515
    %2751 = vst [vmem:[#allocation11 + $0x228] sm:$0xff] %v2517
    %2752 = vst [vmem:[#allocation11 + $0x230] sm:$0xff] %v2628
    %2753 = vst [vmem:[#allocation11 + $0x238] sm:$0xff] %v2630
    %2754 = vst [vmem:[#allocation11 + $0x240] sm:$0xff] %v2293
    %2755 = vst [vmem:[#allocation11 + $0x248] sm:$0xff] %v2295
    %2756 = vst [vmem:[#allocation11 + $0x250] sm:$0xff] %v2406
    %2757 = vst [vmem:[#allocation11 + $0x258] sm:$0xff] %v2408
    %2758 = vst [vmem:[#allocation11 + $0x260] sm:$0xff] %v2519
    %2759 = vst [vmem:[#allocation11 + $0x268] sm:$0xff] %v2521
    %2760 = vst [vmem:[#allocation11 + $0x270] sm:$0xff] %v2632
    %2761 = vst [vmem:[#allocation11 + $0x278] sm:$0xff] %v2634
    %2762 = vst [vmem:[#allocation11 + $0x280] sm:$0xff] %v2299
    %2763 = vst [vmem:[#allocation11 + $0x288] sm:$0xff] %v2301
    %2764 = vst [vmem:[#allocation11 + $0x290] sm:$0xff] %v2412
    %2765 = vst [vmem:[#allocation11 + $0x298] sm:$0xff] %v2414
    %2766 = vst [vmem:[#allocation11 + $0x2a0] sm:$0xff] %v2525
    %2767 = vst [vmem:[#allocation11 + $0x2a8] sm:$0xff] %v2527
    %2768 = vst [vmem:[#allocation11 + $0x2b0] sm:$0xff] %v2638
    %2769 = vst [vmem:[#allocation11 + $0x2b8] sm:$0xff] %v2640
    %2770 = vst [vmem:[#allocation11 + $0x2c0] sm:$0xff] %v2303
    %2771 = vst [vmem:[#allocation11 + $0x2c8] sm:$0xff] %v2305
    %2772 = vst [vmem:[#allocation11 + $0x2d0] sm:$0xff] %v2416
    %2773 = vst [vmem:[#allocation11 + $0x2d8] sm:$0xff] %v2418
    %2774 = vst [vmem:[#allocation11 + $0x2e0] sm:$0xff] %v2529
    %2775 = vst [vmem:[#allocation11 + $0x2e8] sm:$0xff] %v2531
    %2776 = vst [vmem:[#allocation11 + $0x2f0] sm:$0xff] %v2642
    %2777 = vst [vmem:[#allocation11 + $0x2f8] sm:$0xff] %v2644
    %2778 = vst [vmem:[#allocation11 + $0x300] sm:$0xff] %v2309
    %2779 = vst [vmem:[#allocation11 + $0x308] sm:$0xff] %v2311
    %2780 = vst [vmem:[#allocation11 + $0x310] sm:$0xff] %v2422
    %2781 = vst [vmem:[#allocation11 + $0x318] sm:$0xff] %v2424
    %2782 = vst [vmem:[#allocation11 + $0x320] sm:$0xff] %v2535
    %2783 = vst [vmem:[#allocation11 + $0x328] sm:$0xff] %v2537
    %2784 = vst [vmem:[#allocation11 + $0x330] sm:$0xff] %v2648
    %2785 = vst [vmem:[#allocation11 + $0x338] sm:$0xff] %v2650
    %2786 = vst [vmem:[#allocation11 + $0x340] sm:$0xff] %v2313
    %2787 = vst [vmem:[#allocation11 + $0x348] sm:$0xff] %v2315
    %2788 = vst [vmem:[#allocation11 + $0x350] sm:$0xff] %v2426
    %2789 = vst [vmem:[#allocation11 + $0x358] sm:$0xff] %v2428
    %2790 = vst [vmem:[#allocation11 + $0x360] sm:$0xff] %v2539
    %2791 = vst [vmem:[#allocation11 + $0x368] sm:$0xff] %v2541
    %2792 = vst [vmem:[#allocation11 + $0x370] sm:$0xff] %v2652
    %2793 = vst [vmem:[#allocation11 + $0x378] sm:$0xff] %v2654
    %2794 = vst [vmem:[#allocation11 + $0x380] sm:$0xff] %v2319
    %2795 = vst [vmem:[#allocation11 + $0x388] sm:$0xff] %v2321
    %2796 = vst [vmem:[#allocation11 + $0x390] sm:$0xff] %v2432
    %2797 = vst [vmem:[#allocation11 + $0x398] sm:$0xff] %v2434
    %2798 = vst [vmem:[#allocation11 + $0x3a0] sm:$0xff] %v2545
    %2799 = vst [vmem:[#allocation11 + $0x3a8] sm:$0xff] %v2547
    %2800 = vst [vmem:[#allocation11 + $0x3b0] sm:$0xff] %v2658
    %2801 = vst [vmem:[#allocation11 + $0x3b8] sm:$0xff] %v2660
    %2802 = vst [vmem:[#allocation11 + $0x3c0] sm:$0xff] %v2323
    %2803 = vst [vmem:[#allocation11 + $0x3c8] sm:$0xff] %v2325
    %2804 = vst [vmem:[#allocation11 + $0x3d0] sm:$0xff] %v2436
    %2805 = vst [vmem:[#allocation11 + $0x3d8] sm:$0xff] %v2438
    %2806 = vst [vmem:[#allocation11 + $0x3e0] sm:$0xff] %v2549
    %2807 = vst [vmem:[#allocation11 + $0x3e8] sm:$0xff] %v2551
    %2808 = vst [vmem:[#allocation11 + $0x3f0] sm:$0xff] %v2662
    %2809 = vst [vmem:[#allocation11 + $0x3f8] sm:$0xff] %v2664
    // Predicated region
    $region58: #{tpu_custom_call.1} parent=1 // pred_check
      _
    $region59: #{tpu_custom_call.1} parent=1 // pred_check_branch
      %2811 = sbr.rel (0) target = $region61
    $region60: #{tpu_custom_call.1} parent=1 // pred_region
      %s2813 = ssub.s32 16384, 16384
      %2814 = vsyncadd [#allocation4], %s2813
      %s2815 = sshll.u32 [#allocation11], 4
      %s2816 = int_to_ptr.vmem [resolvable:$true] %s2815
      %2821 = dma.vmem_to_hbm [thread:$0]  %s2816, 16384, %s9, [#allocation4], 1024, 1024, 64
    $region61: #{tpu_custom_call.1} parent=1 // pred_fallthru
      _
    // Predicated region
    $region62: #{tpu_custom_call.1} parent=1 // pred_check
      _
    $region63: #{tpu_custom_call.1} parent=1 // pred_check_branch
      %2823 = sbr.rel (0) target = $region65
    $region64: #{tpu_custom_call.1} parent=1 // pred_region
      %s2825 = ssub.s32 2048, 2048
      %2826 = vsyncadd [#allocation13], %s2825
      %s2827 = sshll.u32 [#allocation12], 4
      %s2828 = int_to_ptr.vmem [resolvable:$true] %s2827
      %2833 = dma.vmem_to_hbm [thread:$0]  %s2828, 2048, %s10, [#allocation13], 128, 128, 8
    $region65: #{tpu_custom_call.1} parent=1 // pred_fallthru
      _
    // Predicated region
    $region66: #{tpu_custom_call.1} parent=1 // pred_check
      _
    $region67: #{tpu_custom_call.1} parent=1 // pred_check_branch
      %2835 = sbr.rel (0) target = $region69
    $region68: #{tpu_custom_call.1} parent=1 // pred_region
      %2836 = dma.done [#allocation4], 16384
    $region69: #{tpu_custom_call.1} parent=1 // pred_fallthru
      _
    // Predicated region
    $region70: #{tpu_custom_call.1} parent=1 // pred_check
      _
    $region71: #{tpu_custom_call.1} parent=1 // pred_check_branch
      %2838 = sbr.rel (0) target = $region73
    $region72: #{tpu_custom_call.1} parent=1 // pred_region
      %2839 = dma.done [#allocation13], 2048
    $region73: #{tpu_custom_call.1} parent=1 // pred_fallthru
      _
    %2840 = vsyncpa [#allocation3], 1
    %2841 = vsyncpa [#allocation6], 1
    %2842 = vsyncpa [#allocation9], 1
    %2843 = vsyncpa [#allocation4], 1
    %2844 = vsyncpa [#allocation13], 1

</llo_original>
